<compile_context>
chip_gen: v5e
topology: v5e:2x2
jax: 0.10.0
libtpu: 0.0.40
codegen_flags: <defaults>
</compile_context>

<pallas_src>
import jax
import jax.numpy as jnp
from jax.experimental import pallas as pl
from jax.experimental.pallas import tpu as pltpu

_NEG_SLOPE = 0.01   # PyTorch nn.LeakyReLU() default negative_slope
_IN_PAD = 128       # padded input-feature width (60 -> 128)
_L4_PAD = 128       # padded layer-4 output width (5 -> 128)


def _leaky_relu(v):
    # max(v, 0.01*v): one vmul + one vmax (cheaper than compare+select).
    return jnp.maximum(v, _NEG_SLOPE * v)


def _mish(v):
    # Mish(x) = x * tanh(softplus(x)); softplus threshold=20 like PyTorch.
    sp = jnp.where(v > 20.0, v, jnp.log1p(jnp.exp(jnp.minimum(v, 20.0))))
    return v * jnp.tanh(sp)


def _round_up(n, m):
    return ((n + m - 1) // m) * m


def net_kernel(x_ref,
               w1_ref, b1_ref,
               w2_ref, b2_ref,
               w3_ref, b3_ref,
               w4_ref, b4_ref,
               w5_ref, b5_ref,
               o_ref):
    # ---- Layers 1-4 on the MXU: bf16 operands, f32 accumulation ----
    x = x_ref[...].astype(jnp.bfloat16)                                  # (TB, 128)
    h = _leaky_relu(jnp.dot(x, w1_ref[...],
                            preferred_element_type=jnp.float32) + b1_ref[...])   # (TB, 256)
    h = _leaky_relu(jnp.dot(h.astype(jnp.bfloat16), w2_ref[...],
                            preferred_element_type=jnp.float32) + b2_ref[...])   # (TB, 512)
    h = _leaky_relu(jnp.dot(h.astype(jnp.bfloat16), w3_ref[...],
                            preferred_element_type=jnp.float32) + b3_ref[...])   # (TB, 256)
    # Layer 4 (256 -> 5) as a zero-padded (256,128) matmul.  Padded lanes:
    # dot gives 0 (zero weight cols) + 0 bias = 0, LeakyReLU(0) = 0.
    h4 = _leaky_relu(jnp.dot(h.astype(jnp.bfloat16), w4_ref[...],
                             preferred_element_type=jnp.float32) + b4_ref[...])  # (TB, 128)

    # ---- Layer 5 (5 -> 1): one lane reduction, f32 on the VPU/XLU ----
    # w5 is zero in padded lanes, so padded lanes contribute nothing.
    h5 = jnp.sum(h4 * w5_ref[...], axis=-1, keepdims=True) + b5_ref[...]         # (TB, 1)
    o_ref[...] = _mish(_leaky_relu(h5)).astype(o_ref.dtype)


def init_params(key):
    """PyTorch-style uniform init, stored in the kernel's layout:
       w1: (128, 256) bf16 (rows 60..127 zero);  b1..b3: (1, out) f32;
       w2: (256, 512) bf16;  w3: (512, 256) bf16;
       w4: (256, 128) bf16 (cols 5..127 zero);   b4: (1, 128) f32 (lanes 5..127 zero);
       w5: (1, 128) f32 (lanes 5..127 zero);     b5: (1, 1) f32."""
    dims = [(60, 256), (256, 512), (512, 256), (256, 5), (5, 1)]
    ws, bs = [], []
    for din, dout in dims:
        kw, kb, key = jax.random.split(key, 3)
        bound = 1.0 / (din ** 0.5)
        ws.append(jax.random.uniform(kw, (din, dout), jnp.float32, -bound, bound))
        bs.append(jax.random.uniform(kb, (dout,), jnp.float32, -bound, bound))
    w1, w2, w3, w4, w5 = ws
    b1, b2, b3, b4, b5 = bs

    w1p = jnp.zeros((_IN_PAD, 256), jnp.float32).at[:60, :].set(w1)
    w4p = jnp.zeros((256, _L4_PAD), jnp.float32).at[:, :5].set(w4)
    b4p = jnp.zeros((1, _L4_PAD), jnp.float32).at[0, :5].set(b4)
    w5p = jnp.zeros((1, _L4_PAD), jnp.float32).at[0, :5].set(w5[:, 0])

    return (w1p.astype(jnp.bfloat16), b1.reshape(1, -1),
            w2.astype(jnp.bfloat16),  b2.reshape(1, -1),
            w3.astype(jnp.bfloat16),  b3.reshape(1, -1),
            w4p.astype(jnp.bfloat16), b4p,
            w5p, b5.reshape(1, 1))


def net_forward(x, params, *, tile_b=1024):
    """x: (B, 60) float32.  Returns (B, 1) float32."""
    (w1, b1, w2, b2, w3, b3, w4, b4, w5, b5) = params
    B, F = x.shape

    # Clamp tile for small batches; keep a multiple of 128 (MXU rows / lanes).
    tile_b = min(tile_b, _round_up(max(B, 1), 128))
    assert tile_b % 128 == 0, "tile_b must be a multiple of 128"
    num_tiles = pl.cdiv(B, tile_b)
    b_pad = num_tiles * tile_b

    # Pad batch to a multiple of tile_b and features 60 -> 128 (zero rows of
    # w1 make the extra columns inert).
    x = jnp.pad(x, ((0, b_pad - B), (0, _IN_PAD - F)))

    def const2d(shape):
        # Full-array block with a constant index map: fetched once, then
        # VMEM-resident across all grid steps.
        return pl.BlockSpec(shape, lambda i: (0, 0))

    out = pl.pallas_call(
        net_kernel,
        out_shape=jax.ShapeDtypeStruct((b_pad, 1), jnp.float32),
        grid=(num_tiles,),
        in_specs=[
            pl.BlockSpec((tile_b, _IN_PAD), lambda i: (i, 0)),   # x batch tile
            const2d(w1.shape), const2d(b1.shape),
            const2d(w2.shape), const2d(b2.shape),
            const2d(w3.shape), const2d(b3.shape),
            const2d(w4.shape), const2d(b4.shape),
            const2d(w5.shape), const2d(b5.shape),
        ],
        out_specs=pl.BlockSpec((tile_b, 1), lambda i: (i, 0)),   # natural (TB,1) layout
        compiler_params=pltpu.CompilerParams(
            dimension_semantics=("parallel",),                   # v7x: 2 TCs
            vmem_limit_bytes=48 * 1024 * 1024),                  # headroom for big tiles
    )(x, w1, b1, w2, b2, w3, b3, w4, b4, w5, b5)
    return out[:B, :]


def net_reference(x, params):
    """Pure-JAX reference following the same math path (bf16 MXU inputs,
    f32 accumulation, f32 elementwise tail)."""
    (w1, b1, w2, b2, w3, b3, w4, b4, w5, b5) = params

    def dot_bf16(h, w):
        return jnp.dot(h.astype(jnp.bfloat16), w.astype(jnp.bfloat16),
                       preferred_element_type=jnp.float32)

    xp = jnp.pad(x, ((0, 0), (0, _IN_PAD - x.shape[1])))
    h = _leaky_relu(dot_bf16(xp, w1) + b1)
    h = _leaky_relu(dot_bf16(h, w2) + b2)
    h = _leaky_relu(dot_bf16(h, w3) + b3)
    h4 = _leaky_relu(dot_bf16(h, w4) + b4)                        # (B, 128), padded lanes 0
    h5 = jnp.sum(h4 * w5, axis=-1, keepdims=True) + b5            # (B, 1)
    return _mish(_leaky_relu(h5))


if __name__ == "__main__":
    key = jax.random.PRNGKey(0)
    kx, kp = jax.random.split(key)
    B = 8
    x = jax.random.normal(kx, (B, 60), jnp.float32)
    params = init_params(kp)

    out = jax.block_until_ready(net_forward(x, params))
    ref = jax.block_until_ready(net_reference(x, params))

    assert out.shape == (B, 1), out.shape
    assert jnp.allclose(out, ref, atol=2e-3, rtol=2e-3), (out, ref)
    print("KERNEL_OK")
</pallas_src>

<mosaic_0001>
module attributes {stable_mosaic.version = 11 : i64} {
  func.func @net_kernel(%arg0: i32, %arg1: memref<128x128xf32, #tpu.memory_space<vmem>>, %arg2: memref<128x256xbf16, #tpu.memory_space<vmem>>, %arg3: memref<1x256xf32, #tpu.memory_space<vmem>>, %arg4: memref<256x512xbf16, #tpu.memory_space<vmem>>, %arg5: memref<1x512xf32, #tpu.memory_space<vmem>>, %arg6: memref<512x256xbf16, #tpu.memory_space<vmem>>, %arg7: memref<1x256xf32, #tpu.memory_space<vmem>>, %arg8: memref<256x128xbf16, #tpu.memory_space<vmem>>, %arg9: memref<1x128xf32, #tpu.memory_space<vmem>>, %arg10: memref<1x128xf32, #tpu.memory_space<vmem>>, %arg11: memref<1x1xf32, #tpu.memory_space<vmem>>, %arg12: memref<128x1xf32, #tpu.memory_space<vmem>>) attributes {dimension_semantics = [#tpu.dimension_semantics<parallel>], iteration_bounds = array<i64: 1>, scalar_prefetch = 0 : i64, scratch_operands = 0 : i64, tpu.core_type = #tpu.core_type<tc>, window_params = [{transform_indices = @transform_0, window_bounds = array<i64: 128, 128>}, {pipeline_mode = #tpu.pipeline_mode<synchronous>, transform_indices = @transform_1, window_bounds = array<i64: 128, 256>}, {pipeline_mode = #tpu.pipeline_mode<synchronous>, transform_indices = @transform_2, window_bounds = array<i64: 1, 256>}, {pipeline_mode = #tpu.pipeline_mode<synchronous>, transform_indices = @transform_3, window_bounds = array<i64: 256, 512>}, {pipeline_mode = #tpu.pipeline_mode<synchronous>, transform_indices = @transform_4, window_bounds = array<i64: 1, 512>}, {pipeline_mode = #tpu.pipeline_mode<synchronous>, transform_indices = @transform_5, window_bounds = array<i64: 512, 256>}, {pipeline_mode = #tpu.pipeline_mode<synchronous>, transform_indices = @transform_6, window_bounds = array<i64: 1, 256>}, {pipeline_mode = #tpu.pipeline_mode<synchronous>, transform_indices = @transform_7, window_bounds = array<i64: 256, 128>}, {pipeline_mode = #tpu.pipeline_mode<synchronous>, transform_indices = @transform_8, window_bounds = array<i64: 1, 128>}, {pipeline_mode = #tpu.pipeline_mode<synchronous>, transform_indices = @transform_9, window_bounds = array<i64: 1, 128>}, {pipeline_mode = #tpu.pipeline_mode<synchronous>, transform_indices = @transform_10, window_bounds = array<i64: 1, 1>}, {transform_indices = @transform_11, window_bounds = array<i64: 128, 1>}]} {
    %c0 = arith.constant 0 : index
    %c0_0 = arith.constant 0 : index
    %0 = vector.load %arg1[%c0, %c0_0] : memref<128x128xf32, #tpu.memory_space<vmem>>, vector<128x128xf32>
    %1 = arith.truncf %0 : vector<128x128xf32> to vector<128x128xbf16>
    %c0_1 = arith.constant 0 : index
    %c0_2 = arith.constant 0 : index
    %2 = vector.load %arg2[%c0_1, %c0_2] : memref<128x256xbf16, #tpu.memory_space<vmem>>, vector<128x256xbf16>
    %cst = arith.constant dense<0.000000e+00> : vector<128x256xf32>
    %3 = tpu.matmul %1, %2, %cst {dimension_numbers = #tpu.dot_dimension_numbers<[1], [0], [0], [1], [0, 0, 1, 1], [], []>} : vector<128x128xbf16>, vector<128x256xbf16>, vector<128x256xf32> -> vector<128x256xf32>
    %c0_3 = arith.constant 0 : index
    %c0_4 = arith.constant 0 : index
    %4 = vector.load %arg3[%c0_3, %c0_4] : memref<1x256xf32, #tpu.memory_space<vmem>>, vector<1x256xf32>
    %5 = vector.broadcast %4 : vector<1x256xf32> to vector<128x256xf32>
    %6 = arith.addf %3, %5 : vector<128x256xf32>
    %cst_5 = arith.constant 0.00999999977 : f32
    %7 = vector.broadcast %cst_5 : f32 to vector<128x256xf32>
    %8 = arith.mulf %7, %6 : vector<128x256xf32>
    %9 = arith.maximumf %6, %8 : vector<128x256xf32>
    %10 = arith.truncf %9 : vector<128x256xf32> to vector<128x256xbf16>
    %c0_6 = arith.constant 0 : index
    %c0_7 = arith.constant 0 : index
    %11 = vector.load %arg4[%c0_6, %c0_7] : memref<256x512xbf16, #tpu.memory_space<vmem>>, vector<256x512xbf16>
    %cst_8 = arith.constant dense<0.000000e+00> : vector<128x512xf32>
    %12 = tpu.matmul %10, %11, %cst_8 {dimension_numbers = #tpu.dot_dimension_numbers<[1], [0], [0], [1], [0, 0, 1, 1], [], []>} : vector<128x256xbf16>, vector<256x512xbf16>, vector<128x512xf32> -> vector<128x512xf32>
    %c0_9 = arith.constant 0 : index
    %c0_10 = arith.constant 0 : index
    %13 = vector.load %arg5[%c0_9, %c0_10] : memref<1x512xf32, #tpu.memory_space<vmem>>, vector<1x512xf32>
    %14 = vector.broadcast %13 : vector<1x512xf32> to vector<128x512xf32>
    %15 = arith.addf %12, %14 : vector<128x512xf32>
    %cst_11 = arith.constant 0.00999999977 : f32
    %16 = vector.broadcast %cst_11 : f32 to vector<128x512xf32>
    %17 = arith.mulf %16, %15 : vector<128x512xf32>
    %18 = arith.maximumf %15, %17 : vector<128x512xf32>
    %19 = arith.truncf %18 : vector<128x512xf32> to vector<128x512xbf16>
    %c0_12 = arith.constant 0 : index
    %c0_13 = arith.constant 0 : index
    %20 = vector.load %arg6[%c0_12, %c0_13] : memref<512x256xbf16, #tpu.memory_space<vmem>>, vector<512x256xbf16>
    %cst_14 = arith.constant dense<0.000000e+00> : vector<128x256xf32>
    %21 = tpu.matmul %19, %20, %cst_14 {dimension_numbers = #tpu.dot_dimension_numbers<[1], [0], [0], [1], [0, 0, 1, 1], [], []>} : vector<128x512xbf16>, vector<512x256xbf16>, vector<128x256xf32> -> vector<128x256xf32>
    %c0_15 = arith.constant 0 : index
    %c0_16 = arith.constant 0 : index
    %22 = vector.load %arg7[%c0_15, %c0_16] : memref<1x256xf32, #tpu.memory_space<vmem>>, vector<1x256xf32>
    %23 = vector.broadcast %22 : vector<1x256xf32> to vector<128x256xf32>
    %24 = arith.addf %21, %23 : vector<128x256xf32>
    %cst_17 = arith.constant 0.00999999977 : f32
    %25 = vector.broadcast %cst_17 : f32 to vector<128x256xf32>
    %26 = arith.mulf %25, %24 : vector<128x256xf32>
    %27 = arith.maximumf %24, %26 : vector<128x256xf32>
    %28 = arith.truncf %27 : vector<128x256xf32> to vector<128x256xbf16>
    %c0_18 = arith.constant 0 : index
    %c0_19 = arith.constant 0 : index
    %29 = vector.load %arg8[%c0_18, %c0_19] : memref<256x128xbf16, #tpu.memory_space<vmem>>, vector<256x128xbf16>
    %cst_20 = arith.constant dense<0.000000e+00> : vector<128x128xf32>
    %30 = tpu.matmul %28, %29, %cst_20 {dimension_numbers = #tpu.dot_dimension_numbers<[1], [0], [0], [1], [0, 0, 1, 1], [], []>} : vector<128x256xbf16>, vector<256x128xbf16>, vector<128x128xf32> -> vector<128x128xf32>
    %c0_21 = arith.constant 0 : index
    %c0_22 = arith.constant 0 : index
    %31 = vector.load %arg9[%c0_21, %c0_22] : memref<1x128xf32, #tpu.memory_space<vmem>>, vector<1x128xf32>
    %32 = vector.broadcast %31 : vector<1x128xf32> to vector<128x128xf32>
    %33 = arith.addf %30, %32 : vector<128x128xf32>
    %cst_23 = arith.constant 0.00999999977 : f32
    %34 = vector.broadcast %cst_23 : f32 to vector<128x128xf32>
    %35 = arith.mulf %34, %33 : vector<128x128xf32>
    %36 = arith.maximumf %33, %35 : vector<128x128xf32>
    %c0_24 = arith.constant 0 : index
    %c0_25 = arith.constant 0 : index
    %37 = vector.load %arg10[%c0_24, %c0_25] : memref<1x128xf32, #tpu.memory_space<vmem>>, vector<1x128xf32>
    %38 = vector.broadcast %37 : vector<1x128xf32> to vector<128x128xf32>
    %39 = arith.mulf %36, %38 : vector<128x128xf32>
    %cst_26 = arith.constant dense<0.000000e+00> : vector<128xf32>
    %40 = vector.multi_reduction <add>, %39, %cst_26 [1] : vector<128x128xf32> to vector<128xf32>
    %41 = vector.shape_cast %40 : vector<128xf32> to vector<128x1xf32>
    %c0_27 = arith.constant 0 : index
    %c0_28 = arith.constant 0 : index
    %42 = vector.load %arg11[%c0_27, %c0_28] : memref<1x1xf32, #tpu.memory_space<vmem>>, vector<1x1xf32>
    %43 = vector.broadcast %42 : vector<1x1xf32> to vector<128x1xf32>
    %44 = arith.addf %41, %43 : vector<128x1xf32>
    %cst_29 = arith.constant 0.00999999977 : f32
    %45 = vector.broadcast %cst_29 : f32 to vector<128x1xf32>
    %46 = arith.mulf %45, %44 : vector<128x1xf32>
    %47 = arith.maximumf %44, %46 : vector<128x1xf32>
    %cst_30 = arith.constant 2.000000e+01 : f32
    %48 = vector.broadcast %cst_30 : f32 to vector<128x1xf32>
    %49 = arith.cmpf ogt, %47, %48 : vector<128x1xf32>
    %cst_31 = arith.constant 2.000000e+01 : f32
    %50 = vector.broadcast %cst_31 : f32 to vector<128x1xf32>
    %51 = arith.minimumf %47, %50 : vector<128x1xf32>
    %52 = math.exp %51 : vector<128x1xf32>
    %53 = math.log1p %52 : vector<128x1xf32>
    %54 = arith.select %49, %47, %53 : vector<128x1xi1>, vector<128x1xf32>
    %55 = math.tanh %54 : vector<128x1xf32>
    %56 = arith.mulf %47, %55 : vector<128x1xf32>
    %c0_32 = arith.constant 0 : index
    %c0_33 = arith.constant 0 : index
    %57 = vector.load %arg12[%c0_32, %c0_33] : memref<128x1xf32, #tpu.memory_space<vmem>>, vector<128x1xf32>
    tpu.vector_store %arg12[%c0_32, %c0_33], %56 {strides = array<i32>} : memref<128x1xf32, #tpu.memory_space<vmem>>, vector<128x1xf32>,
    return
  }
  func.func @transform_0(%arg0: i32) -> (i32, i32) {
    %c0_i32 = arith.constant 0 : i32
    %c0_i32_0 = arith.constant 0 : i32
    return %arg0, %c0_i32 : i32, i32
  }
  func.func @transform_1(%arg0: i32) -> (i32, i32) {
    %c0_i32 = arith.constant 0 : i32
    %c0_i32_0 = arith.constant 0 : i32
    %c0_i32_1 = arith.constant 0 : i32
    return %c0_i32, %c0_i32_0 : i32, i32
  }
  func.func @transform_2(%arg0: i32) -> (i32, i32) {
    %c0_i32 = arith.constant 0 : i32
    %c0_i32_0 = arith.constant 0 : i32
    %c0_i32_1 = arith.constant 0 : i32
    return %c0_i32, %c0_i32_0 : i32, i32
  }
  func.func @transform_3(%arg0: i32) -> (i32, i32) {
    %c0_i32 = arith.constant 0 : i32
    %c0_i32_0 = arith.constant 0 : i32
    %c0_i32_1 = arith.constant 0 : i32
    return %c0_i32, %c0_i32_0 : i32, i32
  }
  func.func @transform_4(%arg0: i32) -> (i32, i32) {
    %c0_i32 = arith.constant 0 : i32
    %c0_i32_0 = arith.constant 0 : i32
    %c0_i32_1 = arith.constant 0 : i32
    return %c0_i32, %c0_i32_0 : i32, i32
  }
  func.func @transform_5(%arg0: i32) -> (i32, i32) {
    %c0_i32 = arith.constant 0 : i32
    %c0_i32_0 = arith.constant 0 : i32
    %c0_i32_1 = arith.constant 0 : i32
    return %c0_i32, %c0_i32_0 : i32, i32
  }
  func.func @transform_6(%arg0: i32) -> (i32, i32) {
    %c0_i32 = arith.constant 0 : i32
    %c0_i32_0 = arith.constant 0 : i32
    %c0_i32_1 = arith.constant 0 : i32
    return %c0_i32, %c0_i32_0 : i32, i32
  }
  func.func @transform_7(%arg0: i32) -> (i32, i32) {
    %c0_i32 = arith.constant 0 : i32
    %c0_i32_0 = arith.constant 0 : i32
    %c0_i32_1 = arith.constant 0 : i32
    return %c0_i32, %c0_i32_0 : i32, i32
  }
  func.func @transform_8(%arg0: i32) -> (i32, i32) {
    %c0_i32 = arith.constant 0 : i32
    %c0_i32_0 = arith.constant 0 : i32
    %c0_i32_1 = arith.constant 0 : i32
    return %c0_i32, %c0_i32_0 : i32, i32
  }
  func.func @transform_9(%arg0: i32) -> (i32, i32) {
    %c0_i32 = arith.constant 0 : i32
    %c0_i32_0 = arith.constant 0 : i32
    %c0_i32_1 = arith.constant 0 : i32
    return %c0_i32, %c0_i32_0 : i32, i32
  }
  func.func @transform_10(%arg0: i32) -> (i32, i32) {
    %c0_i32 = arith.constant 0 : i32
    %c0_i32_0 = arith.constant 0 : i32
    %c0_i32_1 = arith.constant 0 : i32
    return %c0_i32, %c0_i32_0 : i32, i32
  }
  func.func @transform_11(%arg0: i32) -> (i32, i32) {
    %c0_i32 = arith.constant 0 : i32
    %c0_i32_0 = arith.constant 0 : i32
    return %arg0, %c0_i32 : i32, i32
  }
}

</mosaic_0001>

<llo_original>
// kernel: tpu_custom_call.1
$region0: #{tpu_custom_call.1}
  #allocation0 [shape = 'u32[]', space=smem, size = 0x4, offset = 0x4, fixed_abs, tag = 'smem constant byte address 0x4 - core index']
  #allocation1 [shape = 'u32[72,128]{1,0:T(1,128)}', space=vmem, size = 0x9000, scoped, tag = 'internal scratch']
  #allocation2 [shape = 'f32[1,1]{1,0:T(1,128)S(1)}', space=vmem, size = 0x200, scoped, tag = 'scoped memory for tpu_custom_call.1']
  %s0 = inlined_call_operand.hbm [shape: f32[128,128], index: 0, kind: input, shape index: {}]
  %s1 = inlined_call_operand.hbm [shape: bf16[128,256], index: 1, kind: input, shape index: {}]
  %s2 = inlined_call_operand.hbm [shape: f32[1,256], index: 2, kind: input, shape index: {}]
  %s3 = inlined_call_operand.hbm [shape: bf16[256,512], index: 3, kind: input, shape index: {}]
  %s4 = inlined_call_operand.vmem [shape: f32[1,512], index: 4, kind: input, shape index: {}]
  %s5 = inlined_call_operand.hbm [shape: bf16[512,256], index: 5, kind: input, shape index: {}]
  %s6 = inlined_call_operand.vmem [shape: f32[1,256], index: 6, kind: input, shape index: {}]
  %s7 = inlined_call_operand.hbm [shape: bf16[256,128], index: 7, kind: input, shape index: {}]
  %s8 = inlined_call_operand.vmem [shape: f32[1,128], index: 8, kind: input, shape index: {}]
  %s9 = inlined_call_operand.vmem [shape: f32[1,128], index: 9, kind: input, shape index: {}]
  %s10 = inlined_call_operand.<no memory space> [shape: f32[1,1], index: 10, kind: input, shape index: {}]
  %s11 = inlined_call_operand.vmem [shape: f32[128,1], index: 11, kind: output, shape index: {}]
  %s12 = sld [smem:[#allocation0]]
  $region78: #{tpu_custom_call.1} parent=0
    _
  %s14 = ssub.s32 1, %s12
  %s15 = scalar_select 0, %s14, %s12
  %v16 = vstv %s10
  %17 = vst [vmem:[#allocation2] sm:$0x1] %v16
  $region1: #{tpu_custom_call.1} parent=0
    #allocation3 [shape = 'u8[65536]{0}', space=vmem, size = 0x10000, scoped, tag = 'input window, operand 0, single buffered']
    #allocation4 [shape = 's32[1]{0}', space=sflag, size = 0x4, scoped, tag = 'scoped memory for tpu_custom_call.1']
    #allocation5 [shape = 'u8[65536]{0}', space=vmem, size = 0x10000, scoped, tag = 'input window, operand 1, single buffered']
    #allocation6 [shape = 's32[1]{0}', space=sflag, size = 0x4, scoped, tag = 'scoped memory for tpu_custom_call.1']
    #allocation7 [shape = 'u8[1024]{0}', space=vmem, size = 0x400, scoped, tag = 'input window, operand 2, single buffered']
    #allocation8 [shape = 'u8[262144]{0}', space=vmem, size = 0x40000, scoped, tag = 'input window, operand 3, single buffered']
    #allocation9 [shape = 's32[1]{0}', space=sflag, size = 0x4, scoped, tag = 'scoped memory for tpu_custom_call.1']
    #allocation10 [shape = 'u8[262144]{0}', space=vmem, size = 0x40000, scoped, tag = 'input window, operand 5, single buffered']
    #allocation11 [shape = 'u8[65536]{0}', space=vmem, size = 0x10000, scoped, tag = 'input window, operand 7, single buffered']
    #allocation12 [shape = 's32[1]{0}', space=sflag, size = 0x4, scoped, tag = 'scoped memory for tpu_custom_call.1']
    %18 = vsyncpa [#allocation4], 0
    %19 = vsyncpa [#allocation6], 0
    %20 = vsyncpa [#allocation9], 0
    %21 = vsyncpa [#allocation12], 0
    // Predicated region
    $region2: #{tpu_custom_call.1} parent=1 // pred_check
      _
    $region3: #{tpu_custom_call.1} parent=1 // pred_check_branch
      %23 = sbr.rel (0) target = $region5
    $region4: #{tpu_custom_call.1} parent=1 // pred_region
      %25 = vsyncadd [#allocation4], 0
      %s26 = sshll.u32 %s0, 4
      %s27 = int_to_ptr.hbm [resolvable:$true] %s26
      %s28 = sshll.u32 [#allocation3], 4
      %s29 = int_to_ptr.vmem [resolvable:$true] %s28
      %34 = dma.hbm_to_vmem [thread:$0]  %s27, 2048, %s29, [#allocation4], 128, 128, 8
    $region5: #{tpu_custom_call.1} parent=1 // pred_fallthru
      _
    // Predicated region
    $region6: #{tpu_custom_call.1} parent=1 // pred_check
      _
    $region7: #{tpu_custom_call.1} parent=1 // pred_check_branch
      %36 = sbr.rel (0) target = $region9
    $region8: #{tpu_custom_call.1} parent=1 // pred_region
      %38 = vsyncadd [#allocation6], 0
      %s39 = sshll.u32 %s1, 4
      %s40 = int_to_ptr.hbm [resolvable:$true] %s39
      %s41 = sshll.u32 [#allocation5], 4
      %s42 = int_to_ptr.vmem [resolvable:$true] %s41
      %47 = dma.hbm_to_vmem [thread:$0]  %s40, 2048, %s42, [#allocation6], 128, 128, 8
    $region9: #{tpu_custom_call.1} parent=1 // pred_fallthru
      _
    // Predicated region
    $region10: #{tpu_custom_call.1} parent=1 // pred_check
      _
    $region11: #{tpu_custom_call.1} parent=1 // pred_check_branch
      %49 = sbr.rel (0) target = $region13
    $region12: #{tpu_custom_call.1} parent=1 // pred_region
      %51 = vsyncadd [#allocation6], 0
      %s53 = sshll.u32 %s2, 4
      %s54 = int_to_ptr.hbm [resolvable:$true] %s53
      %s55 = sshll.u32 [#allocation7], 4
      %s56 = int_to_ptr.vmem [resolvable:$true] %s55
      %58 = dma.hbm_to_vmem [thread:$0]  %s54, 32, %s56, [#allocation6]
    $region13: #{tpu_custom_call.1} parent=1 // pred_fallthru
      _
    // Predicated region
    $region14: #{tpu_custom_call.1} parent=1 // pred_check
      _
    $region15: #{tpu_custom_call.1} parent=1 // pred_check_branch
      %60 = sbr.rel (0) target = $region17
    $region16: #{tpu_custom_call.1} parent=1 // pred_region
      %62 = vsyncadd [#allocation9], 0
      %s63 = sshll.u32 %s3, 4
      %s64 = int_to_ptr.hbm [resolvable:$true] %s63
      %s65 = sshll.u32 [#allocation8], 4
      %s66 = int_to_ptr.vmem [resolvable:$true] %s65
      %71 = dma.hbm_to_vmem [thread:$0]  %s64, 8192, %s66, [#allocation9], 256, 256, 16
    $region17: #{tpu_custom_call.1} parent=1 // pred_fallthru
      _
    // Predicated region
    $region18: #{tpu_custom_call.1} parent=1 // pred_check
      _
    $region19: #{tpu_custom_call.1} parent=1 // pred_check_branch
      %73 = sbr.rel (0) target = $region21
    $region20: #{tpu_custom_call.1} parent=1 // pred_region
      _
    $region21: #{tpu_custom_call.1} parent=1 // pred_fallthru
      _
    // Predicated region
    $region22: #{tpu_custom_call.1} parent=1 // pred_check
      _
    $region23: #{tpu_custom_call.1} parent=1 // pred_check_branch
      %75 = sbr.rel (0) target = $region25
    $region24: #{tpu_custom_call.1} parent=1 // pred_region
      %77 = vsyncadd [#allocation9], 0
      %s78 = sshll.u32 %s5, 4
      %s79 = int_to_ptr.hbm [resolvable:$true] %s78
      %s80 = sshll.u32 [#allocation10], 4
      %s81 = int_to_ptr.vmem [resolvable:$true] %s80
      %86 = dma.hbm_to_vmem [thread:$0]  %s79, 8192, %s81, [#allocation9], 128, 128, 8
    $region25: #{tpu_custom_call.1} parent=1 // pred_fallthru
      _
    // Predicated region
    $region26: #{tpu_custom_call.1} parent=1 // pred_check
      _
    $region27: #{tpu_custom_call.1} parent=1 // pred_check_branch
      %88 = sbr.rel (0) target = $region29
    $region28: #{tpu_custom_call.1} parent=1 // pred_region
      _
    $region29: #{tpu_custom_call.1} parent=1 // pred_fallthru
      _
    // Predicated region
    $region30: #{tpu_custom_call.1} parent=1 // pred_check
      _
    $region31: #{tpu_custom_call.1} parent=1 // pred_check_branch
      %90 = sbr.rel (0) target = $region33
    $region32: #{tpu_custom_call.1} parent=1 // pred_region
      %92 = vsyncadd [#allocation12], 0
      %s93 = sshll.u32 %s7, 4
      %s94 = int_to_ptr.hbm [resolvable:$true] %s93
      %s95 = sshll.u32 [#allocation11], 4
      %s96 = int_to_ptr.vmem [resolvable:$true] %s95
      %101 = dma.hbm_to_vmem [thread:$0]  %s94, 2048, %s96, [#allocation12], 64, 64, 4
    $region33: #{tpu_custom_call.1} parent=1 // pred_fallthru
      _
    // Predicated region
    $region34: #{tpu_custom_call.1} parent=1 // pred_check
      _
    $region35: #{tpu_custom_call.1} parent=1 // pred_check_branch
      %103 = sbr.rel (0) target = $region37
    $region36: #{tpu_custom_call.1} parent=1 // pred_region
      _
    $region37: #{tpu_custom_call.1} parent=1 // pred_fallthru
      _
    // Predicated region
    $region38: #{tpu_custom_call.1} parent=1 // pred_check
      _
    $region39: #{tpu_custom_call.1} parent=1 // pred_check_branch
      %105 = sbr.rel (0) target = $region41
    $region40: #{tpu_custom_call.1} parent=1 // pred_region
      _
    $region41: #{tpu_custom_call.1} parent=1 // pred_fallthru
      _
    // Predicated region
    $region42: #{tpu_custom_call.1} parent=1 // pred_check
      _
    $region43: #{tpu_custom_call.1} parent=1 // pred_check_branch
      %107 = sbr.rel (0) target = $region45
    $region44: #{tpu_custom_call.1} parent=1 // pred_region
      _
    $region45: #{tpu_custom_call.1} parent=1 // pred_fallthru
      _
    // Predicated region
    $region46: #{tpu_custom_call.1} parent=1 // pred_check
      _
    $region47: #{tpu_custom_call.1} parent=1 // pred_check_branch
      %109 = sbr.rel (0) target = $region49
    $region48: #{tpu_custom_call.1} parent=1 // pred_region
      %111 = dma.done [#allocation4], 2048
    $region49: #{tpu_custom_call.1} parent=1 // pred_fallthru
      _
    // Predicated region
    $region50: #{tpu_custom_call.1} parent=1 // pred_check
      _
    $region51: #{tpu_custom_call.1} parent=1 // pred_check_branch
      %113 = sbr.rel (0) target = $region53
    $region52: #{tpu_custom_call.1} parent=1 // pred_region
      %115 = dma.done [#allocation6], 2048
    $region53: #{tpu_custom_call.1} parent=1 // pred_fallthru
      _
    // Predicated region
    $region54: #{tpu_custom_call.1} parent=1 // pred_check
      _
    $region55: #{tpu_custom_call.1} parent=1 // pred_check_branch
      %117 = sbr.rel (0) target = $region57
    $region56: #{tpu_custom_call.1} parent=1 // pred_region
      %119 = dma.done [#allocation6], 32
    $region57: #{tpu_custom_call.1} parent=1 // pred_fallthru
      _
    // Predicated region
    $region58: #{tpu_custom_call.1} parent=1 // pred_check
      _
    $region59: #{tpu_custom_call.1} parent=1 // pred_check_branch
      %121 = sbr.rel (0) target = $region61
    $region60: #{tpu_custom_call.1} parent=1 // pred_region
      %123 = dma.done [#allocation9], 8192
    $region61: #{tpu_custom_call.1} parent=1 // pred_fallthru
      _
    // Predicated region
    $region62: #{tpu_custom_call.1} parent=1 // pred_check
      _
    $region63: #{tpu_custom_call.1} parent=1 // pred_check_branch
      %125 = sbr.rel (0) target = $region65
    $region64: #{tpu_custom_call.1} parent=1 // pred_region
      %127 = dma.done [#allocation9], 8192
    $region65: #{tpu_custom_call.1} parent=1 // pred_fallthru
      _
    // Predicated region
    $region66: #{tpu_custom_call.1} parent=1 // pred_check
      _
    $region67: #{tpu_custom_call.1} parent=1 // pred_check_branch
      %129 = sbr.rel (0) target = $region69
    $region68: #{tpu_custom_call.1} parent=1 // pred_region
      %131 = dma.done [#allocation12], 2048
    $region69: #{tpu_custom_call.1} parent=1 // pred_fallthru
      _
    %v132 = vld [vmem:[#allocation3] sm:$0xff]
    %v133 = vld [vmem:[#allocation3 + $0x8] sm:$0xff]
    %v134 = vld [vmem:[#allocation3 + $0x10] sm:$0xff]
    %v135 = vld [vmem:[#allocation3 + $0x18] sm:$0xff]
    %v136 = vld [vmem:[#allocation3 + $0x20] sm:$0xff]
    %v137 = vld [vmem:[#allocation3 + $0x28] sm:$0xff]
    %v138 = vld [vmem:[#allocation3 + $0x30] sm:$0xff]
    %v139 = vld [vmem:[#allocation3 + $0x38] sm:$0xff]
    %v140 = vld [vmem:[#allocation3 + $0x40] sm:$0xff]
    %v141 = vld [vmem:[#allocation3 + $0x48] sm:$0xff]
    %v142 = vld [vmem:[#allocation3 + $0x50] sm:$0xff]
    %v143 = vld [vmem:[#allocation3 + $0x58] sm:$0xff]
    %v144 = vld [vmem:[#allocation3 + $0x60] sm:$0xff]
    %v145 = vld [vmem:[#allocation3 + $0x68] sm:$0xff]
    %v146 = vld [vmem:[#allocation3 + $0x70] sm:$0xff]
    %v147 = vld [vmem:[#allocation3 + $0x78] sm:$0xff]
    %v148 = vpack.c.bf16 %v133, %v132
    %v149 = vpack.c.bf16 %v135, %v134
    %v150 = vpack.c.bf16 %v137, %v136
    %v151 = vpack.c.bf16 %v139, %v138
    %v152 = vpack.c.bf16 %v141, %v140
    %v153 = vpack.c.bf16 %v143, %v142
    %v154 = vpack.c.bf16 %v145, %v144
    %v155 = vpack.c.bf16 %v147, %v146
    %v156 = vld [vmem:[#allocation5] sm:$0xff]
    %v157 = vld [vmem:[#allocation5 + $0x8] sm:$0xff]
    %v158 = vld [vmem:[#allocation5 + $0x10] sm:$0xff]
    %v159 = vld [vmem:[#allocation5 + $0x18] sm:$0xff]
    %v160 = vld [vmem:[#allocation5 + $0x20] sm:$0xff]
    %v161 = vld [vmem:[#allocation5 + $0x28] sm:$0xff]
    %v162 = vld [vmem:[#allocation5 + $0x30] sm:$0xff]
    %v163 = vld [vmem:[#allocation5 + $0x38] sm:$0xff]
    %v164 = vld [vmem:[#allocation5 + $0x40] sm:$0xff]
    %v165 = vld [vmem:[#allocation5 + $0x48] sm:$0xff]
    %v166 = vld [vmem:[#allocation5 + $0x50] sm:$0xff]
    %v167 = vld [vmem:[#allocation5 + $0x58] sm:$0xff]
    %v168 = vld [vmem:[#allocation5 + $0x60] sm:$0xff]
    %v169 = vld [vmem:[#allocation5 + $0x68] sm:$0xff]
    %v170 = vld [vmem:[#allocation5 + $0x70] sm:$0xff]
    %v171 = vld [vmem:[#allocation5 + $0x78] sm:$0xff]
    %v172 = vld [vmem:[#allocation7] sm:$0x3]
    %v174 = vperm.slane %v172, 0
    %v175 = vperm.slane %v172, 1
    %v194 = vunpack.c.l.b16 %v156
    %v195 = vunpack.c.h.b16 %v156
    %v196 = vunpack.c.l.b16 %v157
    %v197 = vunpack.c.h.b16 %v157
    %v198 = vunpack.c.l.b16 %v158
    %v199 = vunpack.c.h.b16 %v158
    %v200 = vunpack.c.l.b16 %v159
    %v201 = vunpack.c.h.b16 %v159
    %v202 = vunpack.c.l.b16 %v160
    %v203 = vunpack.c.h.b16 %v160
    %v204 = vunpack.c.l.b16 %v161
    %v205 = vunpack.c.h.b16 %v161
    %v206 = vunpack.c.l.b16 %v162
    %v207 = vunpack.c.h.b16 %v162
    %v208 = vunpack.c.l.b16 %v163
    %v209 = vunpack.c.h.b16 %v163
    %v210 = vunpack.c.l.b16 %v164
    %v211 = vunpack.c.h.b16 %v164
    %v212 = vunpack.c.l.b16 %v165
    %v213 = vunpack.c.h.b16 %v165
    %v214 = vunpack.c.l.b16 %v166
    %v215 = vunpack.c.h.b16 %v166
    %v216 = vunpack.c.l.b16 %v167
    %v217 = vunpack.c.h.b16 %v167
    %v218 = vunpack.c.l.b16 %v168
    %v219 = vunpack.c.h.b16 %v168
    %v220 = vunpack.c.l.b16 %v169
    %v221 = vunpack.c.h.b16 %v169
    %v222 = vunpack.c.l.b16 %v170
    %v223 = vunpack.c.h.b16 %v170
    %v224 = vunpack.c.l.b16 %v171
    %v225 = vunpack.c.h.b16 %v171
    %v226 = vpack.c.b16 %v196, %v194
    %v227 = vpack.c.b16 %v197, %v195
    %v228 = vpack.c.b16 %v200, %v198
    %v229 = vpack.c.b16 %v201, %v199
    %v230 = vpack.c.b16 %v204, %v202
    %v231 = vpack.c.b16 %v205, %v203
    %v232 = vpack.c.b16 %v208, %v206
    %v233 = vpack.c.b16 %v209, %v207
    %v234 = vpack.c.b16 %v212, %v210
    %v235 = vpack.c.b16 %v213, %v211
    %v236 = vpack.c.b16 %v216, %v214
    %v237 = vpack.c.b16 %v217, %v215
    %v238 = vpack.c.b16 %v220, %v218
    %v239 = vpack.c.b16 %v221, %v219
    %v240 = vpack.c.b16 %v224, %v222
    %v241 = vpack.c.b16 %v225, %v223
    %258 = vmatpush.bf16.msra.mxu0 %v240
    %259 = vmatpush.bf16.msra.mxu0 %v238
    %260 = vmatpush.bf16.msra.mxu0 %v236
    %261 = vmatpush.bf16.msra.mxu0 %v234
    %262 = vmatpush.bf16.msra.mxu0 %v232
    %263 = vmatpush.bf16.msra.mxu0 %v230
    %264 = vmatpush.bf16.msra.mxu0 %v228
    %265 = vmatpush.bf16.msra.mxu0 %v226
    %266 = vmatmul.bf16.gmra.mxu0 %v148
    %v267 = vpop.f32.mrf.mxu0
    %v268 = vadd.f32 %v174, %v267
    %v269 = vpop.f32.mrf.mxu0
    %v270 = vadd.f32 %v174, %v269
    %271 = vmatmul.bf16.gmra.mxu0 %v149
    %v272 = vpop.f32.mrf.mxu0
    %v273 = vadd.f32 %v174, %v272
    %v274 = vpop.f32.mrf.mxu0
    %v275 = vadd.f32 %v174, %v274
    %276 = vmatmul.bf16.gmra.mxu0 %v150
    %v277 = vpop.f32.mrf.mxu0
    %v278 = vadd.f32 %v174, %v277
    %v279 = vpop.f32.mrf.mxu0
    %v280 = vadd.f32 %v174, %v279
    %281 = vmatmul.bf16.gmra.mxu0 %v151
    %v282 = vpop.f32.mrf.mxu0
    %v283 = vadd.f32 %v174, %v282
    %v284 = vpop.f32.mrf.mxu0
    %v285 = vadd.f32 %v174, %v284
    %286 = vmatmul.bf16.gmra.mxu0 %v152
    %v287 = vpop.f32.mrf.mxu0
    %v288 = vadd.f32 %v174, %v287
    %v289 = vpop.f32.mrf.mxu0
    %v290 = vadd.f32 %v174, %v289
    %291 = vmatmul.bf16.gmra.mxu0 %v153
    %v292 = vpop.f32.mrf.mxu0
    %v293 = vadd.f32 %v174, %v292
    %v294 = vpop.f32.mrf.mxu0
    %v295 = vadd.f32 %v174, %v294
    %296 = vmatmul.bf16.gmra.mxu0 %v154
    %v297 = vpop.f32.mrf.mxu0
    %v298 = vadd.f32 %v174, %v297
    %v299 = vpop.f32.mrf.mxu0
    %v300 = vadd.f32 %v174, %v299
    %301 = vmatmul.bf16.gmra.mxu0 %v155
    %v302 = vpop.f32.mrf.mxu0
    %v303 = vadd.f32 %v174, %v302
    %v304 = vpop.f32.mrf.mxu0
    %v305 = vadd.f32 %v174, %v304
    %306 = vdwg.mxu0
    %307 = vmatpush.bf16.msra.mxu0 %v241
    %308 = vmatpush.bf16.msra.mxu0 %v239
    %309 = vmatpush.bf16.msra.mxu0 %v237
    %310 = vmatpush.bf16.msra.mxu0 %v235
    %311 = vmatpush.bf16.msra.mxu0 %v233
    %312 = vmatpush.bf16.msra.mxu0 %v231
    %313 = vmatpush.bf16.msra.mxu0 %v229
    %314 = vmatpush.bf16.msra.mxu0 %v227
    %315 = vmatmul.bf16.gmra.mxu0 %v148
    %v316 = vpop.f32.mrf.mxu0
    %v317 = vadd.f32 %v175, %v316
    %v318 = vpop.f32.mrf.mxu0
    %v319 = vadd.f32 %v175, %v318
    %320 = vmatmul.bf16.gmra.mxu0 %v149
    %v321 = vpop.f32.mrf.mxu0
    %v322 = vadd.f32 %v175, %v321
    %v323 = vpop.f32.mrf.mxu0
    %v324 = vadd.f32 %v175, %v323
    %325 = vmatmul.bf16.gmra.mxu0 %v150
    %v326 = vpop.f32.mrf.mxu0
    %v327 = vadd.f32 %v175, %v326
    %v328 = vpop.f32.mrf.mxu0
    %v329 = vadd.f32 %v175, %v328
    %330 = vmatmul.bf16.gmra.mxu0 %v151
    %v331 = vpop.f32.mrf.mxu0
    %v332 = vadd.f32 %v175, %v331
    %v333 = vpop.f32.mrf.mxu0
    %v334 = vadd.f32 %v175, %v333
    %335 = vmatmul.bf16.gmra.mxu0 %v152
    %v336 = vpop.f32.mrf.mxu0
    %v337 = vadd.f32 %v175, %v336
    %v338 = vpop.f32.mrf.mxu0
    %v339 = vadd.f32 %v175, %v338
    %340 = vmatmul.bf16.gmra.mxu0 %v153
    %v341 = vpop.f32.mrf.mxu0
    %v342 = vadd.f32 %v175, %v341
    %v343 = vpop.f32.mrf.mxu0
    %v344 = vadd.f32 %v175, %v343
    %345 = vmatmul.bf16.gmra.mxu0 %v154
    %v346 = vpop.f32.mrf.mxu0
    %v347 = vadd.f32 %v175, %v346
    %v348 = vpop.f32.mrf.mxu0
    %v349 = vadd.f32 %v175, %v348
    %350 = vmatmul.bf16.gmra.mxu0 %v155
    %v351 = vpop.f32.mrf.mxu0
    %v352 = vadd.f32 %v175, %v351
    %v353 = vpop.f32.mrf.mxu0
    %v354 = vadd.f32 %v175, %v353
    %355 = vdwg.mxu0
    %v356 = vmul.f32 %v268, 0.01
    %v357 = vmul.f32 %v317, 0.01
    %v358 = vmul.f32 %v270, 0.01
    %v359 = vmul.f32 %v319, 0.01
    %v360 = vmul.f32 %v273, 0.01
    %v361 = vmul.f32 %v322, 0.01
    %v362 = vmul.f32 %v275, 0.01
    %v363 = vmul.f32 %v324, 0.01
    %v364 = vmul.f32 %v278, 0.01
    %v365 = vmul.f32 %v327, 0.01
    %v366 = vmul.f32 %v280, 0.01
    %v367 = vmul.f32 %v329, 0.01
    %v368 = vmul.f32 %v283, 0.01
    %v369 = vmul.f32 %v332, 0.01
    %v370 = vmul.f32 %v285, 0.01
    %v371 = vmul.f32 %v334, 0.01
    %v372 = vmul.f32 %v288, 0.01
    %v373 = vmul.f32 %v337, 0.01
    %v374 = vmul.f32 %v290, 0.01
    %v375 = vmul.f32 %v339, 0.01
    %v376 = vmul.f32 %v293, 0.01
    %v377 = vmul.f32 %v342, 0.01
    %v378 = vmul.f32 %v295, 0.01
    %v379 = vmul.f32 %v344, 0.01
    %v380 = vmul.f32 %v298, 0.01
    %v381 = vmul.f32 %v347, 0.01
    %v382 = vmul.f32 %v300, 0.01
    %v383 = vmul.f32 %v349, 0.01
    %v384 = vmul.f32 %v303, 0.01
    %v385 = vmul.f32 %v352, 0.01
    %v386 = vmul.f32 %v305, 0.01
    %v387 = vmul.f32 %v354, 0.01
    %v388 = vmax.f32 %v268, %v356
    %v389 = vmax.f32 %v317, %v357
    %v390 = vmax.f32 %v270, %v358
    %v391 = vmax.f32 %v319, %v359
    %v392 = vmax.f32 %v273, %v360
    %v393 = vmax.f32 %v322, %v361
    %v394 = vmax.f32 %v275, %v362
    %v395 = vmax.f32 %v324, %v363
    %v396 = vmax.f32 %v278, %v364
    %v397 = vmax.f32 %v327, %v365
    %v398 = vmax.f32 %v280, %v366
    %v399 = vmax.f32 %v329, %v367
    %v400 = vmax.f32 %v283, %v368
    %v401 = vmax.f32 %v332, %v369
    %v402 = vmax.f32 %v285, %v370
    %v403 = vmax.f32 %v334, %v371
    %v404 = vmax.f32 %v288, %v372
    %v405 = vmax.f32 %v337, %v373
    %v406 = vmax.f32 %v290, %v374
    %v407 = vmax.f32 %v339, %v375
    %v408 = vmax.f32 %v293, %v376
    %v409 = vmax.f32 %v342, %v377
    %v410 = vmax.f32 %v295, %v378
    %v411 = vmax.f32 %v344, %v379
    %v412 = vmax.f32 %v298, %v380
    %v413 = vmax.f32 %v347, %v381
    %v414 = vmax.f32 %v300, %v382
    %v415 = vmax.f32 %v349, %v383
    %v416 = vmax.f32 %v303, %v384
    %v417 = vmax.f32 %v352, %v385
    %v418 = vmax.f32 %v305, %v386
    %v419 = vmax.f32 %v354, %v387
    %v420 = vpack.c.bf16 %v390, %v388
    %v421 = vpack.c.bf16 %v391, %v389
    %v422 = vpack.c.bf16 %v394, %v392
    %v423 = vpack.c.bf16 %v395, %v393
    %v424 = vpack.c.bf16 %v398, %v396
    %v425 = vpack.c.bf16 %v399, %v397
    %v426 = vpack.c.bf16 %v402, %v400
    %v427 = vpack.c.bf16 %v403, %v401
    %v428 = vpack.c.bf16 %v406, %v404
    %v429 = vpack.c.bf16 %v407, %v405
    %v430 = vpack.c.bf16 %v410, %v408
    %v431 = vpack.c.bf16 %v411, %v409
    %v432 = vpack.c.bf16 %v414, %v412
    %v433 = vpack.c.bf16 %v415, %v413
    %v434 = vpack.c.bf16 %v418, %v416
    %v435 = vpack.c.bf16 %v419, %v417
    %v436 = vld [vmem:[#allocation8] sm:$0xff]
    %v437 = vld [vmem:[#allocation8 + $0x8] sm:$0xff]
    %v438 = vld [vmem:[#allocation8 + $0x10] sm:$0xff]
    %v439 = vld [vmem:[#allocation8 + $0x18] sm:$0xff]
    %v440 = vld [vmem:[#allocation8 + $0x20] sm:$0xff]
    %v441 = vld [vmem:[#allocation8 + $0x28] sm:$0xff]
    %v442 = vld [vmem:[#allocation8 + $0x30] sm:$0xff]
    %v443 = vld [vmem:[#allocation8 + $0x38] sm:$0xff]
    %v444 = vld [vmem:[#allocation8 + $0x40] sm:$0xff]
    %v445 = vld [vmem:[#allocation8 + $0x48] sm:$0xff]
    %v446 = vld [vmem:[#allocation8 + $0x50] sm:$0xff]
    %v447 = vld [vmem:[#allocation8 + $0x58] sm:$0xff]
    %v448 = vld [vmem:[#allocation8 + $0x60] sm:$0xff]
    %v449 = vld [vmem:[#allocation8 + $0x68] sm:$0xff]
    %v450 = vld [vmem:[#allocation8 + $0x70] sm:$0xff]
    %v451 = vld [vmem:[#allocation8 + $0x78] sm:$0xff]
    %v452 = vld [vmem:[#allocation8 + $0x80] sm:$0xff]
    %v453 = vld [vmem:[#allocation8 + $0x88] sm:$0xff]
    %v454 = vld [vmem:[#allocation8 + $0x90] sm:$0xff]
    %v455 = vld [vmem:[#allocation8 + $0x98] sm:$0xff]
    %v456 = vld [vmem:[#allocation8 + $0xa0] sm:$0xff]
    %v457 = vld [vmem:[#allocation8 + $0xa8] sm:$0xff]
    %v458 = vld [vmem:[#allocation8 + $0xb0] sm:$0xff]
    %v459 = vld [vmem:[#allocation8 + $0xb8] sm:$0xff]
    %v460 = vld [vmem:[#allocation8 + $0xc0] sm:$0xff]
    %v461 = vld [vmem:[#allocation8 + $0xc8] sm:$0xff]
    %v462 = vld [vmem:[#allocation8 + $0xd0] sm:$0xff]
    %v463 = vld [vmem:[#allocation8 + $0xd8] sm:$0xff]
    %v464 = vld [vmem:[#allocation8 + $0xe0] sm:$0xff]
    %v465 = vld [vmem:[#allocation8 + $0xe8] sm:$0xff]
    %v466 = vld [vmem:[#allocation8 + $0xf0] sm:$0xff]
    %v467 = vld [vmem:[#allocation8 + $0xf8] sm:$0xff]
    %v468 = vld [vmem:[#allocation8 + $0x100] sm:$0xff]
    %v469 = vld [vmem:[#allocation8 + $0x108] sm:$0xff]
    %v470 = vld [vmem:[#allocation8 + $0x110] sm:$0xff]
    %v471 = vld [vmem:[#allocation8 + $0x118] sm:$0xff]
    %v472 = vld [vmem:[#allocation8 + $0x120] sm:$0xff]
    %v473 = vld [vmem:[#allocation8 + $0x128] sm:$0xff]
    %v474 = vld [vmem:[#allocation8 + $0x130] sm:$0xff]
    %v475 = vld [vmem:[#allocation8 + $0x138] sm:$0xff]
    %v476 = vld [vmem:[#allocation8 + $0x140] sm:$0xff]
    %v477 = vld [vmem:[#allocation8 + $0x148] sm:$0xff]
    %v478 = vld [vmem:[#allocation8 + $0x150] sm:$0xff]
    %v479 = vld [vmem:[#allocation8 + $0x158] sm:$0xff]
    %v480 = vld [vmem:[#allocation8 + $0x160] sm:$0xff]
    %v481 = vld [vmem:[#allocation8 + $0x168] sm:$0xff]
    %v482 = vld [vmem:[#allocation8 + $0x170] sm:$0xff]
    %v483 = vld [vmem:[#allocation8 + $0x178] sm:$0xff]
    %v484 = vld [vmem:[#allocation8 + $0x180] sm:$0xff]
    %v485 = vld [vmem:[#allocation8 + $0x188] sm:$0xff]
    %v486 = vld [vmem:[#allocation8 + $0x190] sm:$0xff]
    %v487 = vld [vmem:[#allocation8 + $0x198] sm:$0xff]
    %v488 = vld [vmem:[#allocation8 + $0x1a0] sm:$0xff]
    %v489 = vld [vmem:[#allocation8 + $0x1a8] sm:$0xff]
    %v490 = vld [vmem:[#allocation8 + $0x1b0] sm:$0xff]
    %v491 = vld [vmem:[#allocation8 + $0x1b8] sm:$0xff]
    %v492 = vld [vmem:[#allocation8 + $0x1c0] sm:$0xff]
    %v493 = vld [vmem:[#allocation8 + $0x1c8] sm:$0xff]
    %v494 = vld [vmem:[#allocation8 + $0x1d0] sm:$0xff]
    %v495 = vld [vmem:[#allocation8 + $0x1d8] sm:$0xff]
    %v496 = vld [vmem:[#allocation8 + $0x1e0] sm:$0xff]
    %v497 = vld [vmem:[#allocation8 + $0x1e8] sm:$0xff]
    %v498 = vld [vmem:[#allocation8 + $0x1f0] sm:$0xff]
    %v499 = vld [vmem:[#allocation8 + $0x1f8] sm:$0xff]
    %v500 = vld [vmem:[%s4] sm:$0xf]
    %v502 = vperm.slane %v500, 0
    %v503 = vperm.slane %v500, 1
    %v504 = vperm.slane %v500, 2
    %v505 = vperm.slane %v500, 3
    %v574 = vunpack.c.l.b16 %v436
    %v575 = vunpack.c.h.b16 %v436
    %v576 = vunpack.c.l.b16 %v437
    %v577 = vunpack.c.h.b16 %v437
    %v578 = vunpack.c.l.b16 %v438
    %v579 = vunpack.c.h.b16 %v438
    %v580 = vunpack.c.l.b16 %v439
    %v581 = vunpack.c.h.b16 %v439
    %v582 = vunpack.c.l.b16 %v440
    %v583 = vunpack.c.h.b16 %v440
    %v584 = vunpack.c.l.b16 %v441
    %v585 = vunpack.c.h.b16 %v441
    %v586 = vunpack.c.l.b16 %v442
    %v587 = vunpack.c.h.b16 %v442
    %v588 = vunpack.c.l.b16 %v443
    %v589 = vunpack.c.h.b16 %v443
    %v590 = vunpack.c.l.b16 %v444
    %v591 = vunpack.c.h.b16 %v444
    %v592 = vunpack.c.l.b16 %v445
    %v593 = vunpack.c.h.b16 %v445
    %v594 = vunpack.c.l.b16 %v446
    %v595 = vunpack.c.h.b16 %v446
    %v596 = vunpack.c.l.b16 %v447
    %v597 = vunpack.c.h.b16 %v447
    %v598 = vunpack.c.l.b16 %v448
    %v599 = vunpack.c.h.b16 %v448
    %v600 = vunpack.c.l.b16 %v449
    %v601 = vunpack.c.h.b16 %v449
    %v602 = vunpack.c.l.b16 %v450
    %v603 = vunpack.c.h.b16 %v450
    %v604 = vunpack.c.l.b16 %v451
    %v605 = vunpack.c.h.b16 %v451
    %v606 = vunpack.c.l.b16 %v452
    %v607 = vunpack.c.h.b16 %v452
    %v608 = vunpack.c.l.b16 %v453
    %v609 = vunpack.c.h.b16 %v453
    %v610 = vunpack.c.l.b16 %v454
    %v611 = vunpack.c.h.b16 %v454
    %v612 = vunpack.c.l.b16 %v455
    %v613 = vunpack.c.h.b16 %v455
    %v614 = vunpack.c.l.b16 %v456
    %v615 = vunpack.c.h.b16 %v456
    %v616 = vunpack.c.l.b16 %v457
    %v617 = vunpack.c.h.b16 %v457
    %v618 = vunpack.c.l.b16 %v458
    %v619 = vunpack.c.h.b16 %v458
    %v620 = vunpack.c.l.b16 %v459
    %v621 = vunpack.c.h.b16 %v459
    %v622 = vunpack.c.l.b16 %v460
    %v623 = vunpack.c.h.b16 %v460
    %v624 = vunpack.c.l.b16 %v461
    %v625 = vunpack.c.h.b16 %v461
    %v626 = vunpack.c.l.b16 %v462
    %v627 = vunpack.c.h.b16 %v462
    %v628 = vunpack.c.l.b16 %v463
    %v629 = vunpack.c.h.b16 %v463
    %v630 = vunpack.c.l.b16 %v464
    %v631 = vunpack.c.h.b16 %v464
    %v632 = vunpack.c.l.b16 %v465
    %v633 = vunpack.c.h.b16 %v465
    %v634 = vunpack.c.l.b16 %v466
    %v635 = vunpack.c.h.b16 %v466
    %v636 = vunpack.c.l.b16 %v467
    %v637 = vunpack.c.h.b16 %v467
    %v638 = vunpack.c.l.b16 %v468
    %v639 = vunpack.c.h.b16 %v468
    %v640 = vunpack.c.l.b16 %v469
    %v641 = vunpack.c.h.b16 %v469
    %v642 = vunpack.c.l.b16 %v470
    %v643 = vunpack.c.h.b16 %v470
    %v644 = vunpack.c.l.b16 %v471
    %v645 = vunpack.c.h.b16 %v471
    %v646 = vunpack.c.l.b16 %v472
    %v647 = vunpack.c.h.b16 %v472
    %v648 = vunpack.c.l.b16 %v473
    %v649 = vunpack.c.h.b16 %v473
    %v650 = vunpack.c.l.b16 %v474
    %v651 = vunpack.c.h.b16 %v474
    %v652 = vunpack.c.l.b16 %v475
    %v653 = vunpack.c.h.b16 %v475
    %v654 = vunpack.c.l.b16 %v476
    %v655 = vunpack.c.h.b16 %v476
    %v656 = vunpack.c.l.b16 %v477
    %v657 = vunpack.c.h.b16 %v477
    %v658 = vunpack.c.l.b16 %v478
    %v659 = vunpack.c.h.b16 %v478
    %v660 = vunpack.c.l.b16 %v479
    %v661 = vunpack.c.h.b16 %v479
    %v662 = vunpack.c.l.b16 %v480
    %v663 = vunpack.c.h.b16 %v480
    %v664 = vunpack.c.l.b16 %v481
    %v665 = vunpack.c.h.b16 %v481
    %v666 = vunpack.c.l.b16 %v482
    %v667 = vunpack.c.h.b16 %v482
    %v668 = vunpack.c.l.b16 %v483
    %v669 = vunpack.c.h.b16 %v483
    %v670 = vunpack.c.l.b16 %v484
    %v671 = vunpack.c.h.b16 %v484
    %v672 = vunpack.c.l.b16 %v485
    %v673 = vunpack.c.h.b16 %v485
    %v674 = vunpack.c.l.b16 %v486
    %v675 = vunpack.c.h.b16 %v486
    %v676 = vunpack.c.l.b16 %v487
    %v677 = vunpack.c.h.b16 %v487
    %v678 = vunpack.c.l.b16 %v488
    %v679 = vunpack.c.h.b16 %v488
    %v680 = vunpack.c.l.b16 %v489
    %v681 = vunpack.c.h.b16 %v489
    %v682 = vunpack.c.l.b16 %v490
    %v683 = vunpack.c.h.b16 %v490
    %v684 = vunpack.c.l.b16 %v491
    %v685 = vunpack.c.h.b16 %v491
    %v686 = vunpack.c.l.b16 %v492
    %v687 = vunpack.c.h.b16 %v492
    %v688 = vunpack.c.l.b16 %v493
    %v689 = vunpack.c.h.b16 %v493
    %v690 = vunpack.c.l.b16 %v494
    %v691 = vunpack.c.h.b16 %v494
    %v692 = vunpack.c.l.b16 %v495
    %v693 = vunpack.c.h.b16 %v495
    %v694 = vunpack.c.l.b16 %v496
    %v695 = vunpack.c.h.b16 %v496
    %v696 = vunpack.c.l.b16 %v497
    %v697 = vunpack.c.h.b16 %v497
    %v698 = vunpack.c.l.b16 %v498
    %v699 = vunpack.c.h.b16 %v498
    %v700 = vunpack.c.l.b16 %v499
    %v701 = vunpack.c.h.b16 %v499
    %v702 = vpack.c.b16 %v578, %v574
    %v703 = vpack.c.b16 %v579, %v575
    %v704 = vpack.c.b16 %v580, %v576
    %v705 = vpack.c.b16 %v581, %v577
    %v706 = vpack.c.b16 %v586, %v582
    %v707 = vpack.c.b16 %v587, %v583
    %v708 = vpack.c.b16 %v588, %v584
    %v709 = vpack.c.b16 %v589, %v585
    %v710 = vpack.c.b16 %v594, %v590
    %v711 = vpack.c.b16 %v595, %v591
    %v712 = vpack.c.b16 %v596, %v592
    %v713 = vpack.c.b16 %v597, %v593
    %v714 = vpack.c.b16 %v602, %v598
    %v715 = vpack.c.b16 %v603, %v599
    %v716 = vpack.c.b16 %v604, %v600
    %v717 = vpack.c.b16 %v605, %v601
    %v718 = vpack.c.b16 %v610, %v606
    %v719 = vpack.c.b16 %v611, %v607
    %v720 = vpack.c.b16 %v612, %v608
    %v721 = vpack.c.b16 %v613, %v609
    %v722 = vpack.c.b16 %v618, %v614
    %v723 = vpack.c.b16 %v619, %v615
    %v724 = vpack.c.b16 %v620, %v616
    %v725 = vpack.c.b16 %v621, %v617
    %v726 = vpack.c.b16 %v626, %v622
    %v727 = vpack.c.b16 %v627, %v623
    %v728 = vpack.c.b16 %v628, %v624
    %v729 = vpack.c.b16 %v629, %v625
    %v730 = vpack.c.b16 %v634, %v630
    %v731 = vpack.c.b16 %v635, %v631
    %v732 = vpack.c.b16 %v636, %v632
    %v733 = vpack.c.b16 %v637, %v633
    %v734 = vpack.c.b16 %v642, %v638
    %v735 = vpack.c.b16 %v643, %v639
    %v736 = vpack.c.b16 %v644, %v640
    %v737 = vpack.c.b16 %v645, %v641
    %v738 = vpack.c.b16 %v650, %v646
    %v739 = vpack.c.b16 %v651, %v647
    %v740 = vpack.c.b16 %v652, %v648
    %v741 = vpack.c.b16 %v653, %v649
    %v742 = vpack.c.b16 %v658, %v654
    %v743 = vpack.c.b16 %v659, %v655
    %v744 = vpack.c.b16 %v660, %v656
    %v745 = vpack.c.b16 %v661, %v657
    %v746 = vpack.c.b16 %v666, %v662
    %v747 = vpack.c.b16 %v667, %v663
    %v748 = vpack.c.b16 %v668, %v664
    %v749 = vpack.c.b16 %v669, %v665
    %v750 = vpack.c.b16 %v674, %v670
    %v751 = vpack.c.b16 %v675, %v671
    %v752 = vpack.c.b16 %v676, %v672
    %v753 = vpack.c.b16 %v677, %v673
    %v754 = vpack.c.b16 %v682, %v678
    %v755 = vpack.c.b16 %v683, %v679
    %v756 = vpack.c.b16 %v684, %v680
    %v757 = vpack.c.b16 %v685, %v681
    %v758 = vpack.c.b16 %v690, %v686
    %v759 = vpack.c.b16 %v691, %v687
    %v760 = vpack.c.b16 %v692, %v688
    %v761 = vpack.c.b16 %v693, %v689
    %v762 = vpack.c.b16 %v698, %v694
    %v763 = vpack.c.b16 %v699, %v695
    %v764 = vpack.c.b16 %v700, %v696
    %v765 = vpack.c.b16 %v701, %v697
    %830 = vmatpush.bf16.msra.mxu0 %v730
    %831 = vmatpush.bf16.msra.mxu0 %v726
    %832 = vmatpush.bf16.msra.mxu0 %v722
    %833 = vmatpush.bf16.msra.mxu0 %v718
    %834 = vmatpush.bf16.msra.mxu0 %v714
    %835 = vmatpush.bf16.msra.mxu0 %v710
    %836 = vmatpush.bf16.msra.mxu0 %v706
    %837 = vmatpush.bf16.msra.mxu0 %v702
    %838 = vmatmul.bf16.gmra.mxu0 %v420
    %v839 = vpop.f32.mrf.mxu0
    %v840 = vadd.f32 %v502, %v839
    %v841 = vpop.f32.mrf.mxu0
    %v842 = vadd.f32 %v502, %v841
    %843 = vmatmul.bf16.gmra.mxu0 %v422
    %v844 = vpop.f32.mrf.mxu0
    %v845 = vadd.f32 %v502, %v844
    %v846 = vpop.f32.mrf.mxu0
    %v847 = vadd.f32 %v502, %v846
    %848 = vmatmul.bf16.gmra.mxu0 %v424
    %v849 = vpop.f32.mrf.mxu0
    %v850 = vadd.f32 %v502, %v849
    %v851 = vpop.f32.mrf.mxu0
    %v852 = vadd.f32 %v502, %v851
    %853 = vmatmul.bf16.gmra.mxu0 %v426
    %v854 = vpop.f32.mrf.mxu0
    %v855 = vadd.f32 %v502, %v854
    %v856 = vpop.f32.mrf.mxu0
    %v857 = vadd.f32 %v502, %v856
    %858 = vmatmul.bf16.gmra.mxu0 %v428
    %v859 = vpop.f32.mrf.mxu0
    %v860 = vadd.f32 %v502, %v859
    %v861 = vpop.f32.mrf.mxu0
    %v862 = vadd.f32 %v502, %v861
    %863 = vmatmul.bf16.gmra.mxu0 %v430
    %v864 = vpop.f32.mrf.mxu0
    %v865 = vadd.f32 %v502, %v864
    %v866 = vpop.f32.mrf.mxu0
    %v867 = vadd.f32 %v502, %v866
    %868 = vmatmul.bf16.gmra.mxu0 %v432
    %v869 = vpop.f32.mrf.mxu0
    %v870 = vadd.f32 %v502, %v869
    %v871 = vpop.f32.mrf.mxu0
    %v872 = vadd.f32 %v502, %v871
    %873 = vmatmul.bf16.gmra.mxu0 %v434
    %v874 = vpop.f32.mrf.mxu0
    %v875 = vadd.f32 %v502, %v874
    %v876 = vpop.f32.mrf.mxu0
    %v877 = vadd.f32 %v502, %v876
    %878 = vdwg.mxu0
    %879 = vmatpush.bf16.msra.mxu0 %v762
    %880 = vmatpush.bf16.msra.mxu0 %v758
    %881 = vmatpush.bf16.msra.mxu0 %v754
    %882 = vmatpush.bf16.msra.mxu0 %v750
    %883 = vmatpush.bf16.msra.mxu0 %v746
    %884 = vmatpush.bf16.msra.mxu0 %v742
    %885 = vmatpush.bf16.msra.mxu0 %v738
    %886 = vmatpush.bf16.msra.mxu0 %v734
    %887 = vmatmul.bf16.gmra.mxu0 %v421
    %v888 = vpop.f32.mrf.mxu0
    %v889 = vadd.f32 %v840, %v888
    %v890 = vpop.f32.mrf.mxu0
    %v891 = vadd.f32 %v842, %v890
    %892 = vmatmul.bf16.gmra.mxu0 %v423
    %v893 = vpop.f32.mrf.mxu0
    %v894 = vadd.f32 %v845, %v893
    %v895 = vpop.f32.mrf.mxu0
    %v896 = vadd.f32 %v847, %v895
    %897 = vmatmul.bf16.gmra.mxu0 %v425
    %v898 = vpop.f32.mrf.mxu0
    %v899 = vadd.f32 %v850, %v898
    %v900 = vpop.f32.mrf.mxu0
    %v901 = vadd.f32 %v852, %v900
    %902 = vmatmul.bf16.gmra.mxu0 %v427
    %v903 = vpop.f32.mrf.mxu0
    %v904 = vadd.f32 %v855, %v903
    %v905 = vpop.f32.mrf.mxu0
    %v906 = vadd.f32 %v857, %v905
    %907 = vmatmul.bf16.gmra.mxu0 %v429
    %v908 = vpop.f32.mrf.mxu0
    %v909 = vadd.f32 %v860, %v908
    %v910 = vpop.f32.mrf.mxu0
    %v911 = vadd.f32 %v862, %v910
    %912 = vmatmul.bf16.gmra.mxu0 %v431
    %v913 = vpop.f32.mrf.mxu0
    %v914 = vadd.f32 %v865, %v913
    %v915 = vpop.f32.mrf.mxu0
    %v916 = vadd.f32 %v867, %v915
    %917 = vmatmul.bf16.gmra.mxu0 %v433
    %v918 = vpop.f32.mrf.mxu0
    %v919 = vadd.f32 %v870, %v918
    %v920 = vpop.f32.mrf.mxu0
    %v921 = vadd.f32 %v872, %v920
    %922 = vmatmul.bf16.gmra.mxu0 %v435
    %v923 = vpop.f32.mrf.mxu0
    %v924 = vadd.f32 %v875, %v923
    %v925 = vpop.f32.mrf.mxu0
    %v926 = vadd.f32 %v877, %v925
    %927 = vdwg.mxu0
    %928 = vmatpush.bf16.msra.mxu0 %v731
    %929 = vmatpush.bf16.msra.mxu0 %v727
    %930 = vmatpush.bf16.msra.mxu0 %v723
    %931 = vmatpush.bf16.msra.mxu0 %v719
    %932 = vmatpush.bf16.msra.mxu0 %v715
    %933 = vmatpush.bf16.msra.mxu0 %v711
    %934 = vmatpush.bf16.msra.mxu0 %v707
    %935 = vmatpush.bf16.msra.mxu0 %v703
    %936 = vmatmul.bf16.gmra.mxu0 %v420
    %v937 = vpop.f32.mrf.mxu0
    %v938 = vadd.f32 %v503, %v937
    %v939 = vpop.f32.mrf.mxu0
    %v940 = vadd.f32 %v503, %v939
    %941 = vmatmul.bf16.gmra.mxu0 %v422
    %v942 = vpop.f32.mrf.mxu0
    %v943 = vadd.f32 %v503, %v942
    %v944 = vpop.f32.mrf.mxu0
    %v945 = vadd.f32 %v503, %v944
    %946 = vmatmul.bf16.gmra.mxu0 %v424
    %v947 = vpop.f32.mrf.mxu0
    %v948 = vadd.f32 %v503, %v947
    %v949 = vpop.f32.mrf.mxu0
    %v950 = vadd.f32 %v503, %v949
    %951 = vmatmul.bf16.gmra.mxu0 %v426
    %v952 = vpop.f32.mrf.mxu0
    %v953 = vadd.f32 %v503, %v952
    %v954 = vpop.f32.mrf.mxu0
    %v955 = vadd.f32 %v503, %v954
    %956 = vmatmul.bf16.gmra.mxu0 %v428
    %v957 = vpop.f32.mrf.mxu0
    %v958 = vadd.f32 %v503, %v957
    %v959 = vpop.f32.mrf.mxu0
    %v960 = vadd.f32 %v503, %v959
    %961 = vmatmul.bf16.gmra.mxu0 %v430
    %v962 = vpop.f32.mrf.mxu0
    %v963 = vadd.f32 %v503, %v962
    %v964 = vpop.f32.mrf.mxu0
    %v965 = vadd.f32 %v503, %v964
    %966 = vmatmul.bf16.gmra.mxu0 %v432
    %v967 = vpop.f32.mrf.mxu0
    %v968 = vadd.f32 %v503, %v967
    %v969 = vpop.f32.mrf.mxu0
    %v970 = vadd.f32 %v503, %v969
    %971 = vmatmul.bf16.gmra.mxu0 %v434
    %v972 = vpop.f32.mrf.mxu0
    %v973 = vadd.f32 %v503, %v972
    %v974 = vpop.f32.mrf.mxu0
    %v975 = vadd.f32 %v503, %v974
    %976 = vdwg.mxu0
    %977 = vmatpush.bf16.msra.mxu0 %v763
    %978 = vmatpush.bf16.msra.mxu0 %v759
    %979 = vmatpush.bf16.msra.mxu0 %v755
    %980 = vmatpush.bf16.msra.mxu0 %v751
    %981 = vmatpush.bf16.msra.mxu0 %v747
    %982 = vmatpush.bf16.msra.mxu0 %v743
    %983 = vmatpush.bf16.msra.mxu0 %v739
    %984 = vmatpush.bf16.msra.mxu0 %v735
    %985 = vmatmul.bf16.gmra.mxu0 %v421
    %v986 = vpop.f32.mrf.mxu0
    %v987 = vadd.f32 %v938, %v986
    %v988 = vpop.f32.mrf.mxu0
    %v989 = vadd.f32 %v940, %v988
    %990 = vmatmul.bf16.gmra.mxu0 %v423
    %v991 = vpop.f32.mrf.mxu0
    %v992 = vadd.f32 %v943, %v991
    %v993 = vpop.f32.mrf.mxu0
    %v994 = vadd.f32 %v945, %v993
    %995 = vmatmul.bf16.gmra.mxu0 %v425
    %v996 = vpop.f32.mrf.mxu0
    %v997 = vadd.f32 %v948, %v996
    %v998 = vpop.f32.mrf.mxu0
    %v999 = vadd.f32 %v950, %v998
    %1000 = vmatmul.bf16.gmra.mxu0 %v427
    %v1001 = vpop.f32.mrf.mxu0
    %v1002 = vadd.f32 %v953, %v1001
    %v1003 = vpop.f32.mrf.mxu0
    %v1004 = vadd.f32 %v955, %v1003
    %1005 = vmatmul.bf16.gmra.mxu0 %v429
    %v1006 = vpop.f32.mrf.mxu0
    %v1007 = vadd.f32 %v958, %v1006
    %v1008 = vpop.f32.mrf.mxu0
    %v1009 = vadd.f32 %v960, %v1008
    %1010 = vmatmul.bf16.gmra.mxu0 %v431
    %v1011 = vpop.f32.mrf.mxu0
    %v1012 = vadd.f32 %v963, %v1011
    %v1013 = vpop.f32.mrf.mxu0
    %v1014 = vadd.f32 %v965, %v1013
    %1015 = vmatmul.bf16.gmra.mxu0 %v433
    %v1016 = vpop.f32.mrf.mxu0
    %v1017 = vadd.f32 %v968, %v1016
    %v1018 = vpop.f32.mrf.mxu0
    %v1019 = vadd.f32 %v970, %v1018
    %1020 = vmatmul.bf16.gmra.mxu0 %v435
    %v1021 = vpop.f32.mrf.mxu0
    %v1022 = vadd.f32 %v973, %v1021
    %v1023 = vpop.f32.mrf.mxu0
    %v1024 = vadd.f32 %v975, %v1023
    %1025 = vdwg.mxu0
    %1026 = vmatpush.bf16.msra.mxu0 %v732
    %1027 = vmatpush.bf16.msra.mxu0 %v728
    %1028 = vmatpush.bf16.msra.mxu0 %v724
    %1029 = vmatpush.bf16.msra.mxu0 %v720
    %1030 = vmatpush.bf16.msra.mxu0 %v716
    %1031 = vmatpush.bf16.msra.mxu0 %v712
    %1032 = vmatpush.bf16.msra.mxu0 %v708
    %1033 = vmatpush.bf16.msra.mxu0 %v704
    %1034 = vmatmul.bf16.gmra.mxu0 %v420
    %v1035 = vpop.f32.mrf.mxu0
    %v1036 = vadd.f32 %v504, %v1035
    %v1037 = vpop.f32.mrf.mxu0
    %v1038 = vadd.f32 %v504, %v1037
    %1039 = vmatmul.bf16.gmra.mxu0 %v422
    %v1040 = vpop.f32.mrf.mxu0
    %v1041 = vadd.f32 %v504, %v1040
    %v1042 = vpop.f32.mrf.mxu0
    %v1043 = vadd.f32 %v504, %v1042
    %1044 = vmatmul.bf16.gmra.mxu0 %v424
    %v1045 = vpop.f32.mrf.mxu0
    %v1046 = vadd.f32 %v504, %v1045
    %v1047 = vpop.f32.mrf.mxu0
    %v1048 = vadd.f32 %v504, %v1047
    %1049 = vmatmul.bf16.gmra.mxu0 %v426
    %v1050 = vpop.f32.mrf.mxu0
    %v1051 = vadd.f32 %v504, %v1050
    %v1052 = vpop.f32.mrf.mxu0
    %v1053 = vadd.f32 %v504, %v1052
    %1054 = vmatmul.bf16.gmra.mxu0 %v428
    %v1055 = vpop.f32.mrf.mxu0
    %v1056 = vadd.f32 %v504, %v1055
    %v1057 = vpop.f32.mrf.mxu0
    %v1058 = vadd.f32 %v504, %v1057
    %1059 = vmatmul.bf16.gmra.mxu0 %v430
    %v1060 = vpop.f32.mrf.mxu0
    %v1061 = vadd.f32 %v504, %v1060
    %v1062 = vpop.f32.mrf.mxu0
    %v1063 = vadd.f32 %v504, %v1062
    %1064 = vmatmul.bf16.gmra.mxu0 %v432
    %v1065 = vpop.f32.mrf.mxu0
    %v1066 = vadd.f32 %v504, %v1065
    %v1067 = vpop.f32.mrf.mxu0
    %v1068 = vadd.f32 %v504, %v1067
    %1069 = vmatmul.bf16.gmra.mxu0 %v434
    %v1070 = vpop.f32.mrf.mxu0
    %v1071 = vadd.f32 %v504, %v1070
    %v1072 = vpop.f32.mrf.mxu0
    %v1073 = vadd.f32 %v504, %v1072
    %1074 = vdwg.mxu0
    %1075 = vmatpush.bf16.msra.mxu0 %v764
    %1076 = vmatpush.bf16.msra.mxu0 %v760
    %1077 = vmatpush.bf16.msra.mxu0 %v756
    %1078 = vmatpush.bf16.msra.mxu0 %v752
    %1079 = vmatpush.bf16.msra.mxu0 %v748
    %1080 = vmatpush.bf16.msra.mxu0 %v744
    %1081 = vmatpush.bf16.msra.mxu0 %v740
    %1082 = vmatpush.bf16.msra.mxu0 %v736
    %1083 = vmatmul.bf16.gmra.mxu0 %v421
    %v1084 = vpop.f32.mrf.mxu0
    %v1085 = vadd.f32 %v1036, %v1084
    %v1086 = vpop.f32.mrf.mxu0
    %v1087 = vadd.f32 %v1038, %v1086
    %1088 = vmatmul.bf16.gmra.mxu0 %v423
    %v1089 = vpop.f32.mrf.mxu0
    %v1090 = vadd.f32 %v1041, %v1089
    %v1091 = vpop.f32.mrf.mxu0
    %v1092 = vadd.f32 %v1043, %v1091
    %1093 = vmatmul.bf16.gmra.mxu0 %v425
    %v1094 = vpop.f32.mrf.mxu0
    %v1095 = vadd.f32 %v1046, %v1094
    %v1096 = vpop.f32.mrf.mxu0
    %v1097 = vadd.f32 %v1048, %v1096
    %1098 = vmatmul.bf16.gmra.mxu0 %v427
    %v1099 = vpop.f32.mrf.mxu0
    %v1100 = vadd.f32 %v1051, %v1099
    %v1101 = vpop.f32.mrf.mxu0
    %v1102 = vadd.f32 %v1053, %v1101
    %1103 = vmatmul.bf16.gmra.mxu0 %v429
    %v1104 = vpop.f32.mrf.mxu0
    %v1105 = vadd.f32 %v1056, %v1104
    %v1106 = vpop.f32.mrf.mxu0
    %v1107 = vadd.f32 %v1058, %v1106
    %1108 = vmatmul.bf16.gmra.mxu0 %v431
    %v1109 = vpop.f32.mrf.mxu0
    %v1110 = vadd.f32 %v1061, %v1109
    %v1111 = vpop.f32.mrf.mxu0
    %v1112 = vadd.f32 %v1063, %v1111
    %1113 = vmatmul.bf16.gmra.mxu0 %v433
    %v1114 = vpop.f32.mrf.mxu0
    %v1115 = vadd.f32 %v1066, %v1114
    %v1116 = vpop.f32.mrf.mxu0
    %v1117 = vadd.f32 %v1068, %v1116
    %1118 = vmatmul.bf16.gmra.mxu0 %v435
    %v1119 = vpop.f32.mrf.mxu0
    %v1120 = vadd.f32 %v1071, %v1119
    %v1121 = vpop.f32.mrf.mxu0
    %v1122 = vadd.f32 %v1073, %v1121
    %1123 = vdwg.mxu0
    %1124 = vmatpush.bf16.msra.mxu0 %v733
    %1125 = vmatpush.bf16.msra.mxu0 %v729
    %1126 = vmatpush.bf16.msra.mxu0 %v725
    %1127 = vmatpush.bf16.msra.mxu0 %v721
    %1128 = vmatpush.bf16.msra.mxu0 %v717
    %1129 = vmatpush.bf16.msra.mxu0 %v713
    %1130 = vmatpush.bf16.msra.mxu0 %v709
    %1131 = vmatpush.bf16.msra.mxu0 %v705
    %1132 = vmatmul.bf16.gmra.mxu0 %v420
    %v1133 = vpop.f32.mrf.mxu0
    %v1134 = vadd.f32 %v505, %v1133
    %v1135 = vpop.f32.mrf.mxu0
    %v1136 = vadd.f32 %v505, %v1135
    %1137 = vmatmul.bf16.gmra.mxu0 %v422
    %v1138 = vpop.f32.mrf.mxu0
    %v1139 = vadd.f32 %v505, %v1138
    %v1140 = vpop.f32.mrf.mxu0
    %v1141 = vadd.f32 %v505, %v1140
    %1142 = vmatmul.bf16.gmra.mxu0 %v424
    %v1143 = vpop.f32.mrf.mxu0
    %v1144 = vadd.f32 %v505, %v1143
    %v1145 = vpop.f32.mrf.mxu0
    %v1146 = vadd.f32 %v505, %v1145
    %1147 = vmatmul.bf16.gmra.mxu0 %v426
    %v1148 = vpop.f32.mrf.mxu0
    %v1149 = vadd.f32 %v505, %v1148
    %v1150 = vpop.f32.mrf.mxu0
    %v1151 = vadd.f32 %v505, %v1150
    %1152 = vmatmul.bf16.gmra.mxu0 %v428
    %v1153 = vpop.f32.mrf.mxu0
    %v1154 = vadd.f32 %v505, %v1153
    %v1155 = vpop.f32.mrf.mxu0
    %v1156 = vadd.f32 %v505, %v1155
    %1157 = vmatmul.bf16.gmra.mxu0 %v430
    %v1158 = vpop.f32.mrf.mxu0
    %v1159 = vadd.f32 %v505, %v1158
    %v1160 = vpop.f32.mrf.mxu0
    %v1161 = vadd.f32 %v505, %v1160
    %1162 = vmatmul.bf16.gmra.mxu0 %v432
    %v1163 = vpop.f32.mrf.mxu0
    %v1164 = vadd.f32 %v505, %v1163
    %v1165 = vpop.f32.mrf.mxu0
    %v1166 = vadd.f32 %v505, %v1165
    %1167 = vmatmul.bf16.gmra.mxu0 %v434
    %v1168 = vpop.f32.mrf.mxu0
    %v1169 = vadd.f32 %v505, %v1168
    %v1170 = vpop.f32.mrf.mxu0
    %v1171 = vadd.f32 %v505, %v1170
    %1172 = vdwg.mxu0
    %1173 = vmatpush.bf16.msra.mxu0 %v765
    %1174 = vmatpush.bf16.msra.mxu0 %v761
    %1175 = vmatpush.bf16.msra.mxu0 %v757
    %1176 = vmatpush.bf16.msra.mxu0 %v753
    %1177 = vmatpush.bf16.msra.mxu0 %v749
    %1178 = vmatpush.bf16.msra.mxu0 %v745
    %1179 = vmatpush.bf16.msra.mxu0 %v741
    %1180 = vmatpush.bf16.msra.mxu0 %v737
    %1181 = vmatmul.bf16.gmra.mxu0 %v421
    %v1182 = vpop.f32.mrf.mxu0
    %v1183 = vadd.f32 %v1134, %v1182
    %v1184 = vpop.f32.mrf.mxu0
    %v1185 = vadd.f32 %v1136, %v1184
    %1186 = vmatmul.bf16.gmra.mxu0 %v423
    %v1187 = vpop.f32.mrf.mxu0
    %v1188 = vadd.f32 %v1139, %v1187
    %v1189 = vpop.f32.mrf.mxu0
    %v1190 = vadd.f32 %v1141, %v1189
    %1191 = vmatmul.bf16.gmra.mxu0 %v425
    %v1192 = vpop.f32.mrf.mxu0
    %v1193 = vadd.f32 %v1144, %v1192
    %v1194 = vpop.f32.mrf.mxu0
    %v1195 = vadd.f32 %v1146, %v1194
    %1196 = vmatmul.bf16.gmra.mxu0 %v427
    %v1197 = vpop.f32.mrf.mxu0
    %v1198 = vadd.f32 %v1149, %v1197
    %v1199 = vpop.f32.mrf.mxu0
    %v1200 = vadd.f32 %v1151, %v1199
    %1201 = vmatmul.bf16.gmra.mxu0 %v429
    %v1202 = vpop.f32.mrf.mxu0
    %v1203 = vadd.f32 %v1154, %v1202
    %v1204 = vpop.f32.mrf.mxu0
    %v1205 = vadd.f32 %v1156, %v1204
    %1206 = vmatmul.bf16.gmra.mxu0 %v431
    %v1207 = vpop.f32.mrf.mxu0
    %v1208 = vadd.f32 %v1159, %v1207
    %v1209 = vpop.f32.mrf.mxu0
    %v1210 = vadd.f32 %v1161, %v1209
    %1211 = vmatmul.bf16.gmra.mxu0 %v433
    %v1212 = vpop.f32.mrf.mxu0
    %v1213 = vadd.f32 %v1164, %v1212
    %v1214 = vpop.f32.mrf.mxu0
    %v1215 = vadd.f32 %v1166, %v1214
    %1216 = vmatmul.bf16.gmra.mxu0 %v435
    %v1217 = vpop.f32.mrf.mxu0
    %v1218 = vadd.f32 %v1169, %v1217
    %v1219 = vpop.f32.mrf.mxu0
    %v1220 = vadd.f32 %v1171, %v1219
    %1221 = vdwg.mxu0
    %v1222 = vmul.f32 %v889, 0.01
    %v1223 = vmul.f32 %v987, 0.01
    %v1224 = vmul.f32 %v1085, 0.01
    %v1225 = vmul.f32 %v1183, 0.01
    %v1226 = vmul.f32 %v891, 0.01
    %v1227 = vmul.f32 %v989, 0.01
    %v1228 = vmul.f32 %v1087, 0.01
    %v1229 = vmul.f32 %v1185, 0.01
    %v1230 = vmul.f32 %v894, 0.01
    %v1231 = vmul.f32 %v992, 0.01
    %v1232 = vmul.f32 %v1090, 0.01
    %v1233 = vmul.f32 %v1188, 0.01
    %v1234 = vmul.f32 %v896, 0.01
    %v1235 = vmul.f32 %v994, 0.01
    %v1236 = vmul.f32 %v1092, 0.01
    %v1237 = vmul.f32 %v1190, 0.01
    %v1238 = vmul.f32 %v899, 0.01
    %v1239 = vmul.f32 %v997, 0.01
    %v1240 = vmul.f32 %v1095, 0.01
    %v1241 = vmul.f32 %v1193, 0.01
    %v1242 = vmul.f32 %v901, 0.01
    %v1243 = vmul.f32 %v999, 0.01
    %v1244 = vmul.f32 %v1097, 0.01
    %v1245 = vmul.f32 %v1195, 0.01
    %v1246 = vmul.f32 %v904, 0.01
    %v1247 = vmul.f32 %v1002, 0.01
    %v1248 = vmul.f32 %v1100, 0.01
    %v1249 = vmul.f32 %v1198, 0.01
    %v1250 = vmul.f32 %v906, 0.01
    %v1251 = vmul.f32 %v1004, 0.01
    %v1252 = vmul.f32 %v1102, 0.01
    %v1253 = vmul.f32 %v1200, 0.01
    %v1254 = vmul.f32 %v909, 0.01
    %v1255 = vmul.f32 %v1007, 0.01
    %v1256 = vmul.f32 %v1105, 0.01
    %v1257 = vmul.f32 %v1203, 0.01
    %v1258 = vmul.f32 %v911, 0.01
    %v1259 = vmul.f32 %v1009, 0.01
    %v1260 = vmul.f32 %v1107, 0.01
    %v1261 = vmul.f32 %v1205, 0.01
    %v1262 = vmul.f32 %v914, 0.01
    %v1263 = vmul.f32 %v1012, 0.01
    %v1264 = vmul.f32 %v1110, 0.01
    %v1265 = vmul.f32 %v1208, 0.01
    %v1266 = vmul.f32 %v916, 0.01
    %v1267 = vmul.f32 %v1014, 0.01
    %v1268 = vmul.f32 %v1112, 0.01
    %v1269 = vmul.f32 %v1210, 0.01
    %v1270 = vmul.f32 %v919, 0.01
    %v1271 = vmul.f32 %v1017, 0.01
    %v1272 = vmul.f32 %v1115, 0.01
    %v1273 = vmul.f32 %v1213, 0.01
    %v1274 = vmul.f32 %v921, 0.01
    %v1275 = vmul.f32 %v1019, 0.01
    %v1276 = vmul.f32 %v1117, 0.01
    %v1277 = vmul.f32 %v1215, 0.01
    %v1278 = vmul.f32 %v924, 0.01
    %v1279 = vmul.f32 %v1022, 0.01
    %v1280 = vmul.f32 %v1120, 0.01
    %v1281 = vmul.f32 %v1218, 0.01
    %v1282 = vmul.f32 %v926, 0.01
    %v1283 = vmul.f32 %v1024, 0.01
    %v1284 = vmul.f32 %v1122, 0.01
    %v1285 = vmul.f32 %v1220, 0.01
    %v1286 = vmax.f32 %v889, %v1222
    %v1287 = vmax.f32 %v987, %v1223
    %v1288 = vmax.f32 %v1085, %v1224
    %v1289 = vmax.f32 %v1183, %v1225
    %v1290 = vmax.f32 %v891, %v1226
    %v1291 = vmax.f32 %v989, %v1227
    %v1292 = vmax.f32 %v1087, %v1228
    %v1293 = vmax.f32 %v1185, %v1229
    %v1294 = vmax.f32 %v894, %v1230
    %v1295 = vmax.f32 %v992, %v1231
    %v1296 = vmax.f32 %v1090, %v1232
    %v1297 = vmax.f32 %v1188, %v1233
    %v1298 = vmax.f32 %v896, %v1234
    %v1299 = vmax.f32 %v994, %v1235
    %v1300 = vmax.f32 %v1092, %v1236
    %v1301 = vmax.f32 %v1190, %v1237
    %v1302 = vmax.f32 %v899, %v1238
    %v1303 = vmax.f32 %v997, %v1239
    %v1304 = vmax.f32 %v1095, %v1240
    %v1305 = vmax.f32 %v1193, %v1241
    %v1306 = vmax.f32 %v901, %v1242
    %v1307 = vmax.f32 %v999, %v1243
    %v1308 = vmax.f32 %v1097, %v1244
    %v1309 = vmax.f32 %v1195, %v1245
    %v1310 = vmax.f32 %v904, %v1246
    %v1311 = vmax.f32 %v1002, %v1247
    %v1312 = vmax.f32 %v1100, %v1248
    %v1313 = vmax.f32 %v1198, %v1249
    %v1314 = vmax.f32 %v906, %v1250
    %v1315 = vmax.f32 %v1004, %v1251
    %v1316 = vmax.f32 %v1102, %v1252
    %v1317 = vmax.f32 %v1200, %v1253
    %v1318 = vmax.f32 %v909, %v1254
    %v1319 = vmax.f32 %v1007, %v1255
    %v1320 = vmax.f32 %v1105, %v1256
    %v1321 = vmax.f32 %v1203, %v1257
    %v1322 = vmax.f32 %v911, %v1258
    %v1323 = vmax.f32 %v1009, %v1259
    %v1324 = vmax.f32 %v1107, %v1260
    %v1325 = vmax.f32 %v1205, %v1261
    %v1326 = vmax.f32 %v914, %v1262
    %v1327 = vmax.f32 %v1012, %v1263
    %v1328 = vmax.f32 %v1110, %v1264
    %v1329 = vmax.f32 %v1208, %v1265
    %v1330 = vmax.f32 %v916, %v1266
    %v1331 = vmax.f32 %v1014, %v1267
    %v1332 = vmax.f32 %v1112, %v1268
    %v1333 = vmax.f32 %v1210, %v1269
    %v1334 = vmax.f32 %v919, %v1270
    %v1335 = vmax.f32 %v1017, %v1271
    %v1336 = vmax.f32 %v1115, %v1272
    %v1337 = vmax.f32 %v1213, %v1273
    %v1338 = vmax.f32 %v921, %v1274
    %v1339 = vmax.f32 %v1019, %v1275
    %v1340 = vmax.f32 %v1117, %v1276
    %v1341 = vmax.f32 %v1215, %v1277
    %v1342 = vmax.f32 %v924, %v1278
    %v1343 = vmax.f32 %v1022, %v1279
    %v1344 = vmax.f32 %v1120, %v1280
    %v1345 = vmax.f32 %v1218, %v1281
    %v1346 = vmax.f32 %v926, %v1282
    %v1347 = vmax.f32 %v1024, %v1283
    %v1348 = vmax.f32 %v1122, %v1284
    %v1349 = vmax.f32 %v1220, %v1285
    %v1350 = vpack.c.bf16 %v1290, %v1286
    %v1351 = vpack.c.bf16 %v1291, %v1287
    %v1352 = vpack.c.bf16 %v1292, %v1288
    %v1353 = vpack.c.bf16 %v1293, %v1289
    %v1354 = vpack.c.bf16 %v1298, %v1294
    %v1355 = vpack.c.bf16 %v1299, %v1295
    %v1356 = vpack.c.bf16 %v1300, %v1296
    %v1357 = vpack.c.bf16 %v1301, %v1297
    %v1358 = vpack.c.bf16 %v1306, %v1302
    %v1359 = vpack.c.bf16 %v1307, %v1303
    %v1360 = vpack.c.bf16 %v1308, %v1304
    %v1361 = vpack.c.bf16 %v1309, %v1305
    %v1362 = vpack.c.bf16 %v1314, %v1310
    %v1363 = vpack.c.bf16 %v1315, %v1311
    %v1364 = vpack.c.bf16 %v1316, %v1312
    %v1365 = vpack.c.bf16 %v1317, %v1313
    %v1366 = vpack.c.bf16 %v1322, %v1318
    %v1367 = vpack.c.bf16 %v1323, %v1319
    %v1368 = vpack.c.bf16 %v1324, %v1320
    %v1369 = vpack.c.bf16 %v1325, %v1321
    %v1370 = vpack.c.bf16 %v1330, %v1326
    %v1371 = vpack.c.bf16 %v1331, %v1327
    %v1372 = vpack.c.bf16 %v1332, %v1328
    %v1373 = vpack.c.bf16 %v1333, %v1329
    %v1374 = vpack.c.bf16 %v1338, %v1334
    %v1375 = vpack.c.bf16 %v1339, %v1335
    %v1376 = vpack.c.bf16 %v1340, %v1336
    %v1377 = vpack.c.bf16 %v1341, %v1337
    %v1378 = vpack.c.bf16 %v1346, %v1342
    %v1379 = vpack.c.bf16 %v1347, %v1343
    %v1380 = vpack.c.bf16 %v1348, %v1344
    %v1381 = vpack.c.bf16 %v1349, %v1345
    %v1382 = vld [vmem:[#allocation10] sm:$0xff]
    %v1383 = vld [vmem:[#allocation10 + $0x8] sm:$0xff]
    %v1384 = vld [vmem:[#allocation10 + $0x10] sm:$0xff]
    %v1385 = vld [vmem:[#allocation10 + $0x18] sm:$0xff]
    %v1386 = vld [vmem:[#allocation10 + $0x20] sm:$0xff]
    %v1387 = vld [vmem:[#allocation10 + $0x28] sm:$0xff]
    %v1388 = vld [vmem:[#allocation10 + $0x30] sm:$0xff]
    %v1389 = vld [vmem:[#allocation10 + $0x38] sm:$0xff]
    %v1390 = vld [vmem:[#allocation10 + $0x40] sm:$0xff]
    %v1391 = vld [vmem:[#allocation10 + $0x48] sm:$0xff]
    %v1392 = vld [vmem:[#allocation10 + $0x50] sm:$0xff]
    %v1393 = vld [vmem:[#allocation10 + $0x58] sm:$0xff]
    %v1394 = vld [vmem:[#allocation10 + $0x60] sm:$0xff]
    %v1395 = vld [vmem:[#allocation10 + $0x68] sm:$0xff]
    %v1396 = vld [vmem:[#allocation10 + $0x70] sm:$0xff]
    %v1397 = vld [vmem:[#allocation10 + $0x78] sm:$0xff]
    %v1398 = vld [vmem:[#allocation10 + $0x80] sm:$0xff]
    %v1399 = vld [vmem:[#allocation10 + $0x88] sm:$0xff]
    %v1400 = vld [vmem:[#allocation10 + $0x90] sm:$0xff]
    %v1401 = vld [vmem:[#allocation10 + $0x98] sm:$0xff]
    %v1402 = vld [vmem:[#allocation10 + $0xa0] sm:$0xff]
    %v1403 = vld [vmem:[#allocation10 + $0xa8] sm:$0xff]
    %v1404 = vld [vmem:[#allocation10 + $0xb0] sm:$0xff]
    %v1405 = vld [vmem:[#allocation10 + $0xb8] sm:$0xff]
    %v1406 = vld [vmem:[#allocation10 + $0xc0] sm:$0xff]
    %v1407 = vld [vmem:[#allocation10 + $0xc8] sm:$0xff]
    %v1408 = vld [vmem:[#allocation10 + $0xd0] sm:$0xff]
    %v1409 = vld [vmem:[#allocation10 + $0xd8] sm:$0xff]
    %v1410 = vld [vmem:[#allocation10 + $0xe0] sm:$0xff]
    %v1411 = vld [vmem:[#allocation10 + $0xe8] sm:$0xff]
    %v1412 = vld [vmem:[#allocation10 + $0xf0] sm:$0xff]
    %v1413 = vld [vmem:[#allocation10 + $0xf8] sm:$0xff]
    %v1414 = vld [vmem:[#allocation10 + $0x100] sm:$0xff]
    %v1415 = vld [vmem:[#allocation10 + $0x108] sm:$0xff]
    %v1416 = vld [vmem:[#allocation10 + $0x110] sm:$0xff]
    %v1417 = vld [vmem:[#allocation10 + $0x118] sm:$0xff]
    %v1418 = vld [vmem:[#allocation10 + $0x120] sm:$0xff]
    %v1419 = vld [vmem:[#allocation10 + $0x128] sm:$0xff]
    %v1420 = vld [vmem:[#allocation10 + $0x130] sm:$0xff]
    %v1421 = vld [vmem:[#allocation10 + $0x138] sm:$0xff]
    %v1422 = vld [vmem:[#allocation10 + $0x140] sm:$0xff]
    %v1423 = vld [vmem:[#allocation10 + $0x148] sm:$0xff]
    %v1424 = vld [vmem:[#allocation10 + $0x150] sm:$0xff]
    %v1425 = vld [vmem:[#allocation10 + $0x158] sm:$0xff]
    %v1426 = vld [vmem:[#allocation10 + $0x160] sm:$0xff]
    %v1427 = vld [vmem:[#allocation10 + $0x168] sm:$0xff]
    %v1428 = vld [vmem:[#allocation10 + $0x170] sm:$0xff]
    %v1429 = vld [vmem:[#allocation10 + $0x178] sm:$0xff]
    %v1430 = vld [vmem:[#allocation10 + $0x180] sm:$0xff]
    %v1431 = vld [vmem:[#allocation10 + $0x188] sm:$0xff]
    %v1432 = vld [vmem:[#allocation10 + $0x190] sm:$0xff]
    %v1433 = vld [vmem:[#allocation10 + $0x198] sm:$0xff]
    %v1434 = vld [vmem:[#allocation10 + $0x1a0] sm:$0xff]
    %v1435 = vld [vmem:[#allocation10 + $0x1a8] sm:$0xff]
    %v1436 = vld [vmem:[#allocation10 + $0x1b0] sm:$0xff]
    %v1437 = vld [vmem:[#allocation10 + $0x1b8] sm:$0xff]
    %v1438 = vld [vmem:[#allocation10 + $0x1c0] sm:$0xff]
    %v1439 = vld [vmem:[#allocation10 + $0x1c8] sm:$0xff]
    %v1440 = vld [vmem:[#allocation10 + $0x1d0] sm:$0xff]
    %v1441 = vld [vmem:[#allocation10 + $0x1d8] sm:$0xff]
    %v1442 = vld [vmem:[#allocation10 + $0x1e0] sm:$0xff]
    %v1443 = vld [vmem:[#allocation10 + $0x1e8] sm:$0xff]
    %v1444 = vld [vmem:[#allocation10 + $0x1f0] sm:$0xff]
    %v1445 = vld [vmem:[#allocation10 + $0x1f8] sm:$0xff]
    %v1446 = vld [vmem:[%s6] sm:$0x3]
    %v1448 = vperm.slane %v1446, 0
    %v1449 = vperm.slane %v1446, 1
    %v1516 = vunpack.c.l.b16 %v1382
    %v1517 = vunpack.c.h.b16 %v1382
    %v1518 = vunpack.c.l.b16 %v1383
    %v1519 = vunpack.c.h.b16 %v1383
    %v1520 = vunpack.c.l.b16 %v1384
    %v1521 = vunpack.c.h.b16 %v1384
    %v1522 = vunpack.c.l.b16 %v1385
    %v1523 = vunpack.c.h.b16 %v1385
    %v1524 = vunpack.c.l.b16 %v1386
    %v1525 = vunpack.c.h.b16 %v1386
    %v1526 = vunpack.c.l.b16 %v1387
    %v1527 = vunpack.c.h.b16 %v1387
    %v1528 = vunpack.c.l.b16 %v1388
    %v1529 = vunpack.c.h.b16 %v1388
    %v1530 = vunpack.c.l.b16 %v1389
    %v1531 = vunpack.c.h.b16 %v1389
    %v1532 = vunpack.c.l.b16 %v1390
    %v1533 = vunpack.c.h.b16 %v1390
    %v1534 = vunpack.c.l.b16 %v1391
    %v1535 = vunpack.c.h.b16 %v1391
    %v1536 = vunpack.c.l.b16 %v1392
    %v1537 = vunpack.c.h.b16 %v1392
    %v1538 = vunpack.c.l.b16 %v1393
    %v1539 = vunpack.c.h.b16 %v1393
    %v1540 = vunpack.c.l.b16 %v1394
    %v1541 = vunpack.c.h.b16 %v1394
    %v1542 = vunpack.c.l.b16 %v1395
    %v1543 = vunpack.c.h.b16 %v1395
    %v1544 = vunpack.c.l.b16 %v1396
    %v1545 = vunpack.c.h.b16 %v1396
    %v1546 = vunpack.c.l.b16 %v1397
    %v1547 = vunpack.c.h.b16 %v1397
    %v1548 = vunpack.c.l.b16 %v1398
    %v1549 = vunpack.c.h.b16 %v1398
    %v1550 = vunpack.c.l.b16 %v1399
    %v1551 = vunpack.c.h.b16 %v1399
    %v1552 = vunpack.c.l.b16 %v1400
    %v1553 = vunpack.c.h.b16 %v1400
    %v1554 = vunpack.c.l.b16 %v1401
    %v1555 = vunpack.c.h.b16 %v1401
    %v1556 = vunpack.c.l.b16 %v1402
    %v1557 = vunpack.c.h.b16 %v1402
    %v1558 = vunpack.c.l.b16 %v1403
    %v1559 = vunpack.c.h.b16 %v1403
    %v1560 = vunpack.c.l.b16 %v1404
    %v1561 = vunpack.c.h.b16 %v1404
    %v1562 = vunpack.c.l.b16 %v1405
    %v1563 = vunpack.c.h.b16 %v1405
    %v1564 = vunpack.c.l.b16 %v1406
    %v1565 = vunpack.c.h.b16 %v1406
    %v1566 = vunpack.c.l.b16 %v1407
    %v1567 = vunpack.c.h.b16 %v1407
    %v1568 = vunpack.c.l.b16 %v1408
    %v1569 = vunpack.c.h.b16 %v1408
    %v1570 = vunpack.c.l.b16 %v1409
    %v1571 = vunpack.c.h.b16 %v1409
    %v1572 = vunpack.c.l.b16 %v1410
    %v1573 = vunpack.c.h.b16 %v1410
    %v1574 = vunpack.c.l.b16 %v1411
    %v1575 = vunpack.c.h.b16 %v1411
    %v1576 = vunpack.c.l.b16 %v1412
    %v1577 = vunpack.c.h.b16 %v1412
    %v1578 = vunpack.c.l.b16 %v1413
    %v1579 = vunpack.c.h.b16 %v1413
    %v1580 = vunpack.c.l.b16 %v1414
    %v1581 = vunpack.c.h.b16 %v1414
    %v1582 = vunpack.c.l.b16 %v1415
    %v1583 = vunpack.c.h.b16 %v1415
    %v1584 = vunpack.c.l.b16 %v1416
    %v1585 = vunpack.c.h.b16 %v1416
    %v1586 = vunpack.c.l.b16 %v1417
    %v1587 = vunpack.c.h.b16 %v1417
    %v1588 = vunpack.c.l.b16 %v1418
    %v1589 = vunpack.c.h.b16 %v1418
    %v1590 = vunpack.c.l.b16 %v1419
    %v1591 = vunpack.c.h.b16 %v1419
    %v1592 = vunpack.c.l.b16 %v1420
    %v1593 = vunpack.c.h.b16 %v1420
    %v1594 = vunpack.c.l.b16 %v1421
    %v1595 = vunpack.c.h.b16 %v1421
    %v1596 = vunpack.c.l.b16 %v1422
    %v1597 = vunpack.c.h.b16 %v1422
    %v1598 = vunpack.c.l.b16 %v1423
    %v1599 = vunpack.c.h.b16 %v1423
    %v1600 = vunpack.c.l.b16 %v1424
    %v1601 = vunpack.c.h.b16 %v1424
    %v1602 = vunpack.c.l.b16 %v1425
    %v1603 = vunpack.c.h.b16 %v1425
    %v1604 = vunpack.c.l.b16 %v1426
    %v1605 = vunpack.c.h.b16 %v1426
    %v1606 = vunpack.c.l.b16 %v1427
    %v1607 = vunpack.c.h.b16 %v1427
    %v1608 = vunpack.c.l.b16 %v1428
    %v1609 = vunpack.c.h.b16 %v1428
    %v1610 = vunpack.c.l.b16 %v1429
    %v1611 = vunpack.c.h.b16 %v1429
    %v1612 = vunpack.c.l.b16 %v1430
    %v1613 = vunpack.c.h.b16 %v1430
    %v1614 = vunpack.c.l.b16 %v1431
    %v1615 = vunpack.c.h.b16 %v1431
    %v1616 = vunpack.c.l.b16 %v1432
    %v1617 = vunpack.c.h.b16 %v1432
    %v1618 = vunpack.c.l.b16 %v1433
    %v1619 = vunpack.c.h.b16 %v1433
    %v1620 = vunpack.c.l.b16 %v1434
    %v1621 = vunpack.c.h.b16 %v1434
    %v1622 = vunpack.c.l.b16 %v1435
    %v1623 = vunpack.c.h.b16 %v1435
    %v1624 = vunpack.c.l.b16 %v1436
    %v1625 = vunpack.c.h.b16 %v1436
    %v1626 = vunpack.c.l.b16 %v1437
    %v1627 = vunpack.c.h.b16 %v1437
    %v1628 = vunpack.c.l.b16 %v1438
    %v1629 = vunpack.c.h.b16 %v1438
    %v1630 = vunpack.c.l.b16 %v1439
    %v1631 = vunpack.c.h.b16 %v1439
    %v1632 = vunpack.c.l.b16 %v1440
    %v1633 = vunpack.c.h.b16 %v1440
    %v1634 = vunpack.c.l.b16 %v1441
    %v1635 = vunpack.c.h.b16 %v1441
    %v1636 = vunpack.c.l.b16 %v1442
    %v1637 = vunpack.c.h.b16 %v1442
    %v1638 = vunpack.c.l.b16 %v1443
    %v1639 = vunpack.c.h.b16 %v1443
    %v1640 = vunpack.c.l.b16 %v1444
    %v1641 = vunpack.c.h.b16 %v1444
    %v1642 = vunpack.c.l.b16 %v1445
    %v1643 = vunpack.c.h.b16 %v1445
    %v1644 = vpack.c.b16 %v1518, %v1516
    %v1645 = vpack.c.b16 %v1519, %v1517
    %v1646 = vpack.c.b16 %v1522, %v1520
    %v1647 = vpack.c.b16 %v1523, %v1521
    %v1648 = vpack.c.b16 %v1526, %v1524
    %v1649 = vpack.c.b16 %v1527, %v1525
    %v1650 = vpack.c.b16 %v1530, %v1528
    %v1651 = vpack.c.b16 %v1531, %v1529
    %v1652 = vpack.c.b16 %v1534, %v1532
    %v1653 = vpack.c.b16 %v1535, %v1533
    %v1654 = vpack.c.b16 %v1538, %v1536
    %v1655 = vpack.c.b16 %v1539, %v1537
    %v1656 = vpack.c.b16 %v1542, %v1540
    %v1657 = vpack.c.b16 %v1543, %v1541
    %v1658 = vpack.c.b16 %v1546, %v1544
    %v1659 = vpack.c.b16 %v1547, %v1545
    %v1660 = vpack.c.b16 %v1550, %v1548
    %v1661 = vpack.c.b16 %v1551, %v1549
    %v1662 = vpack.c.b16 %v1554, %v1552
    %v1663 = vpack.c.b16 %v1555, %v1553
    %v1664 = vpack.c.b16 %v1558, %v1556
    %v1665 = vpack.c.b16 %v1559, %v1557
    %v1666 = vpack.c.b16 %v1562, %v1560
    %v1667 = vpack.c.b16 %v1563, %v1561
    %v1668 = vpack.c.b16 %v1566, %v1564
    %v1669 = vpack.c.b16 %v1567, %v1565
    %v1670 = vpack.c.b16 %v1570, %v1568
    %v1671 = vpack.c.b16 %v1571, %v1569
    %v1672 = vpack.c.b16 %v1574, %v1572
    %v1673 = vpack.c.b16 %v1575, %v1573
    %v1674 = vpack.c.b16 %v1578, %v1576
    %v1675 = vpack.c.b16 %v1579, %v1577
    %v1676 = vpack.c.b16 %v1582, %v1580
    %v1677 = vpack.c.b16 %v1583, %v1581
    %v1678 = vpack.c.b16 %v1586, %v1584
    %v1679 = vpack.c.b16 %v1587, %v1585
    %v1680 = vpack.c.b16 %v1590, %v1588
    %v1681 = vpack.c.b16 %v1591, %v1589
    %v1682 = vpack.c.b16 %v1594, %v1592
    %v1683 = vpack.c.b16 %v1595, %v1593
    %v1684 = vpack.c.b16 %v1598, %v1596
    %v1685 = vpack.c.b16 %v1599, %v1597
    %v1686 = vpack.c.b16 %v1602, %v1600
    %v1687 = vpack.c.b16 %v1603, %v1601
    %v1688 = vpack.c.b16 %v1606, %v1604
    %v1689 = vpack.c.b16 %v1607, %v1605
    %v1690 = vpack.c.b16 %v1610, %v1608
    %v1691 = vpack.c.b16 %v1611, %v1609
    %v1692 = vpack.c.b16 %v1614, %v1612
    %v1693 = vpack.c.b16 %v1615, %v1613
    %v1694 = vpack.c.b16 %v1618, %v1616
    %v1695 = vpack.c.b16 %v1619, %v1617
    %v1696 = vpack.c.b16 %v1622, %v1620
    %v1697 = vpack.c.b16 %v1623, %v1621
    %v1698 = vpack.c.b16 %v1626, %v1624
    %v1699 = vpack.c.b16 %v1627, %v1625
    %v1700 = vpack.c.b16 %v1630, %v1628
    %v1701 = vpack.c.b16 %v1631, %v1629
    %v1702 = vpack.c.b16 %v1634, %v1632
    %v1703 = vpack.c.b16 %v1635, %v1633
    %v1704 = vpack.c.b16 %v1638, %v1636
    %v1705 = vpack.c.b16 %v1639, %v1637
    %v1706 = vpack.c.b16 %v1642, %v1640
    %v1707 = vpack.c.b16 %v1643, %v1641
    %1772 = vmatpush.bf16.msra.mxu0 %v1658
    %1773 = vmatpush.bf16.msra.mxu0 %v1656
    %1774 = vmatpush.bf16.msra.mxu0 %v1654
    %1775 = vmatpush.bf16.msra.mxu0 %v1652
    %1776 = vmatpush.bf16.msra.mxu0 %v1650
    %1777 = vmatpush.bf16.msra.mxu0 %v1648
    %1778 = vmatpush.bf16.msra.mxu0 %v1646
    %1779 = vmatpush.bf16.msra.mxu0 %v1644
    %1780 = vmatmul.bf16.gmra.mxu0 %v1350
    %v1781 = vpop.f32.mrf.mxu0
    %v1782 = vadd.f32 %v1448, %v1781
    %v1783 = vpop.f32.mrf.mxu0
    %v1784 = vadd.f32 %v1448, %v1783
    %1785 = vmatmul.bf16.gmra.mxu0 %v1354
    %v1786 = vpop.f32.mrf.mxu0
    %v1787 = vadd.f32 %v1448, %v1786
    %v1788 = vpop.f32.mrf.mxu0
    %v1789 = vadd.f32 %v1448, %v1788
    %1790 = vmatmul.bf16.gmra.mxu0 %v1358
    %v1791 = vpop.f32.mrf.mxu0
    %v1792 = vadd.f32 %v1448, %v1791
    %v1793 = vpop.f32.mrf.mxu0
    %v1794 = vadd.f32 %v1448, %v1793
    %1795 = vmatmul.bf16.gmra.mxu0 %v1362
    %v1796 = vpop.f32.mrf.mxu0
    %v1797 = vadd.f32 %v1448, %v1796
    %v1798 = vpop.f32.mrf.mxu0
    %v1799 = vadd.f32 %v1448, %v1798
    %1800 = vmatmul.bf16.gmra.mxu0 %v1366
    %v1801 = vpop.f32.mrf.mxu0
    %v1802 = vadd.f32 %v1448, %v1801
    %v1803 = vpop.f32.mrf.mxu0
    %v1804 = vadd.f32 %v1448, %v1803
    %1805 = vmatmul.bf16.gmra.mxu0 %v1370
    %v1806 = vpop.f32.mrf.mxu0
    %v1807 = vadd.f32 %v1448, %v1806
    %v1808 = vpop.f32.mrf.mxu0
    %v1809 = vadd.f32 %v1448, %v1808
    %1810 = vmatmul.bf16.gmra.mxu0 %v1374
    %v1811 = vpop.f32.mrf.mxu0
    %v1812 = vadd.f32 %v1448, %v1811
    %v1813 = vpop.f32.mrf.mxu0
    %v1814 = vadd.f32 %v1448, %v1813
    %1815 = vmatmul.bf16.gmra.mxu0 %v1378
    %v1816 = vpop.f32.mrf.mxu0
    %v1817 = vadd.f32 %v1448, %v1816
    %v1818 = vpop.f32.mrf.mxu0
    %v1819 = vadd.f32 %v1448, %v1818
    %1820 = vdwg.mxu0
    %1821 = vmatpush.bf16.msra.mxu0 %v1674
    %1822 = vmatpush.bf16.msra.mxu0 %v1672
    %1823 = vmatpush.bf16.msra.mxu0 %v1670
    %1824 = vmatpush.bf16.msra.mxu0 %v1668
    %1825 = vmatpush.bf16.msra.mxu0 %v1666
    %1826 = vmatpush.bf16.msra.mxu0 %v1664
    %1827 = vmatpush.bf16.msra.mxu0 %v1662
    %1828 = vmatpush.bf16.msra.mxu0 %v1660
    %1829 = vmatmul.bf16.gmra.mxu0 %v1351
    %v1830 = vpop.f32.mrf.mxu0
    %v1831 = vadd.f32 %v1782, %v1830
    %v1832 = vpop.f32.mrf.mxu0
    %v1833 = vadd.f32 %v1784, %v1832
    %1834 = vmatmul.bf16.gmra.mxu0 %v1355
    %v1835 = vpop.f32.mrf.mxu0
    %v1836 = vadd.f32 %v1787, %v1835
    %v1837 = vpop.f32.mrf.mxu0
    %v1838 = vadd.f32 %v1789, %v1837
    %1839 = vmatmul.bf16.gmra.mxu0 %v1359
    %v1840 = vpop.f32.mrf.mxu0
    %v1841 = vadd.f32 %v1792, %v1840
    %v1842 = vpop.f32.mrf.mxu0
    %v1843 = vadd.f32 %v1794, %v1842
    %1844 = vmatmul.bf16.gmra.mxu0 %v1363
    %v1845 = vpop.f32.mrf.mxu0
    %v1846 = vadd.f32 %v1797, %v1845
    %v1847 = vpop.f32.mrf.mxu0
    %v1848 = vadd.f32 %v1799, %v1847
    %1849 = vmatmul.bf16.gmra.mxu0 %v1367
    %v1850 = vpop.f32.mrf.mxu0
    %v1851 = vadd.f32 %v1802, %v1850
    %v1852 = vpop.f32.mrf.mxu0
    %v1853 = vadd.f32 %v1804, %v1852
    %1854 = vmatmul.bf16.gmra.mxu0 %v1371
    %v1855 = vpop.f32.mrf.mxu0
    %v1856 = vadd.f32 %v1807, %v1855
    %v1857 = vpop.f32.mrf.mxu0
    %v1858 = vadd.f32 %v1809, %v1857
    %1859 = vmatmul.bf16.gmra.mxu0 %v1375
    %v1860 = vpop.f32.mrf.mxu0
    %v1861 = vadd.f32 %v1812, %v1860
    %v1862 = vpop.f32.mrf.mxu0
    %v1863 = vadd.f32 %v1814, %v1862
    %1864 = vmatmul.bf16.gmra.mxu0 %v1379
    %v1865 = vpop.f32.mrf.mxu0
    %v1866 = vadd.f32 %v1817, %v1865
    %v1867 = vpop.f32.mrf.mxu0
    %v1868 = vadd.f32 %v1819, %v1867
    %1869 = vdwg.mxu0
    %1870 = vmatpush.bf16.msra.mxu0 %v1690
    %1871 = vmatpush.bf16.msra.mxu0 %v1688
    %1872 = vmatpush.bf16.msra.mxu0 %v1686
    %1873 = vmatpush.bf16.msra.mxu0 %v1684
    %1874 = vmatpush.bf16.msra.mxu0 %v1682
    %1875 = vmatpush.bf16.msra.mxu0 %v1680
    %1876 = vmatpush.bf16.msra.mxu0 %v1678
    %1877 = vmatpush.bf16.msra.mxu0 %v1676
    %1878 = vmatmul.bf16.gmra.mxu0 %v1352
    %v1879 = vpop.f32.mrf.mxu0
    %v1880 = vadd.f32 %v1831, %v1879
    %v1881 = vpop.f32.mrf.mxu0
    %v1882 = vadd.f32 %v1833, %v1881
    %1883 = vmatmul.bf16.gmra.mxu0 %v1356
    %v1884 = vpop.f32.mrf.mxu0
    %v1885 = vadd.f32 %v1836, %v1884
    %v1886 = vpop.f32.mrf.mxu0
    %v1887 = vadd.f32 %v1838, %v1886
    %1888 = vmatmul.bf16.gmra.mxu0 %v1360
    %v1889 = vpop.f32.mrf.mxu0
    %v1890 = vadd.f32 %v1841, %v1889
    %v1891 = vpop.f32.mrf.mxu0
    %v1892 = vadd.f32 %v1843, %v1891
    %1893 = vmatmul.bf16.gmra.mxu0 %v1364
    %v1894 = vpop.f32.mrf.mxu0
    %v1895 = vadd.f32 %v1846, %v1894
    %v1896 = vpop.f32.mrf.mxu0
    %v1897 = vadd.f32 %v1848, %v1896
    %1898 = vmatmul.bf16.gmra.mxu0 %v1368
    %v1899 = vpop.f32.mrf.mxu0
    %v1900 = vadd.f32 %v1851, %v1899
    %v1901 = vpop.f32.mrf.mxu0
    %v1902 = vadd.f32 %v1853, %v1901
    %1903 = vmatmul.bf16.gmra.mxu0 %v1372
    %v1904 = vpop.f32.mrf.mxu0
    %v1905 = vadd.f32 %v1856, %v1904
    %v1906 = vpop.f32.mrf.mxu0
    %v1907 = vadd.f32 %v1858, %v1906
    %1908 = vmatmul.bf16.gmra.mxu0 %v1376
    %v1909 = vpop.f32.mrf.mxu0
    %v1910 = vadd.f32 %v1861, %v1909
    %v1911 = vpop.f32.mrf.mxu0
    %v1912 = vadd.f32 %v1863, %v1911
    %1913 = vmatmul.bf16.gmra.mxu0 %v1380
    %v1914 = vpop.f32.mrf.mxu0
    %v1915 = vadd.f32 %v1866, %v1914
    %v1916 = vpop.f32.mrf.mxu0
    %v1917 = vadd.f32 %v1868, %v1916
    %1918 = vdwg.mxu0
    %1919 = vmatpush.bf16.msra.mxu0 %v1706
    %1920 = vmatpush.bf16.msra.mxu0 %v1704
    %1921 = vmatpush.bf16.msra.mxu0 %v1702
    %1922 = vmatpush.bf16.msra.mxu0 %v1700
    %1923 = vmatpush.bf16.msra.mxu0 %v1698
    %1924 = vmatpush.bf16.msra.mxu0 %v1696
    %1925 = vmatpush.bf16.msra.mxu0 %v1694
    %1926 = vmatpush.bf16.msra.mxu0 %v1692
    %1927 = vmatmul.bf16.gmra.mxu0 %v1353
    %v1928 = vpop.f32.mrf.mxu0
    %v1929 = vadd.f32 %v1880, %v1928
    %v1930 = vpop.f32.mrf.mxu0
    %v1931 = vadd.f32 %v1882, %v1930
    %1932 = vmatmul.bf16.gmra.mxu0 %v1357
    %v1933 = vpop.f32.mrf.mxu0
    %v1934 = vadd.f32 %v1885, %v1933
    %v1935 = vpop.f32.mrf.mxu0
    %v1936 = vadd.f32 %v1887, %v1935
    %1937 = vmatmul.bf16.gmra.mxu0 %v1361
    %v1938 = vpop.f32.mrf.mxu0
    %v1939 = vadd.f32 %v1890, %v1938
    %v1940 = vpop.f32.mrf.mxu0
    %v1941 = vadd.f32 %v1892, %v1940
    %1942 = vmatmul.bf16.gmra.mxu0 %v1365
    %v1943 = vpop.f32.mrf.mxu0
    %v1944 = vadd.f32 %v1895, %v1943
    %v1945 = vpop.f32.mrf.mxu0
    %v1946 = vadd.f32 %v1897, %v1945
    %1947 = vmatmul.bf16.gmra.mxu0 %v1369
    %v1948 = vpop.f32.mrf.mxu0
    %v1949 = vadd.f32 %v1900, %v1948
    %v1950 = vpop.f32.mrf.mxu0
    %v1951 = vadd.f32 %v1902, %v1950
    %1952 = vmatmul.bf16.gmra.mxu0 %v1373
    %v1953 = vpop.f32.mrf.mxu0
    %v1954 = vadd.f32 %v1905, %v1953
    %v1955 = vpop.f32.mrf.mxu0
    %v1956 = vadd.f32 %v1907, %v1955
    %1957 = vmatmul.bf16.gmra.mxu0 %v1377
    %v1958 = vpop.f32.mrf.mxu0
    %v1959 = vadd.f32 %v1910, %v1958
    %v1960 = vpop.f32.mrf.mxu0
    %v1961 = vadd.f32 %v1912, %v1960
    %1962 = vmatmul.bf16.gmra.mxu0 %v1381
    %v1963 = vpop.f32.mrf.mxu0
    %v1964 = vadd.f32 %v1915, %v1963
    %v1965 = vpop.f32.mrf.mxu0
    %v1966 = vadd.f32 %v1917, %v1965
    %1967 = vdwg.mxu0
    %1968 = vmatpush.bf16.msra.mxu0 %v1659
    %1969 = vmatpush.bf16.msra.mxu0 %v1657
    %1970 = vmatpush.bf16.msra.mxu0 %v1655
    %1971 = vmatpush.bf16.msra.mxu0 %v1653
    %1972 = vmatpush.bf16.msra.mxu0 %v1651
    %1973 = vmatpush.bf16.msra.mxu0 %v1649
    %1974 = vmatpush.bf16.msra.mxu0 %v1647
    %1975 = vmatpush.bf16.msra.mxu0 %v1645
    %1976 = vmatmul.bf16.gmra.mxu0 %v1350
    %v1977 = vpop.f32.mrf.mxu0
    %v1978 = vadd.f32 %v1449, %v1977
    %v1979 = vpop.f32.mrf.mxu0
    %v1980 = vadd.f32 %v1449, %v1979
    %1981 = vmatmul.bf16.gmra.mxu0 %v1354
    %v1982 = vpop.f32.mrf.mxu0
    %v1983 = vadd.f32 %v1449, %v1982
    %v1984 = vpop.f32.mrf.mxu0
    %v1985 = vadd.f32 %v1449, %v1984
    %1986 = vmatmul.bf16.gmra.mxu0 %v1358
    %v1987 = vpop.f32.mrf.mxu0
    %v1988 = vadd.f32 %v1449, %v1987
    %v1989 = vpop.f32.mrf.mxu0
    %v1990 = vadd.f32 %v1449, %v1989
    %1991 = vmatmul.bf16.gmra.mxu0 %v1362
    %v1992 = vpop.f32.mrf.mxu0
    %v1993 = vadd.f32 %v1449, %v1992
    %v1994 = vpop.f32.mrf.mxu0
    %v1995 = vadd.f32 %v1449, %v1994
    %1996 = vmatmul.bf16.gmra.mxu0 %v1366
    %v1997 = vpop.f32.mrf.mxu0
    %v1998 = vadd.f32 %v1449, %v1997
    %v1999 = vpop.f32.mrf.mxu0
    %v2000 = vadd.f32 %v1449, %v1999
    %2001 = vmatmul.bf16.gmra.mxu0 %v1370
    %v2002 = vpop.f32.mrf.mxu0
    %v2003 = vadd.f32 %v1449, %v2002
    %v2004 = vpop.f32.mrf.mxu0
    %v2005 = vadd.f32 %v1449, %v2004
    %2006 = vmatmul.bf16.gmra.mxu0 %v1374
    %v2007 = vpop.f32.mrf.mxu0
    %v2008 = vadd.f32 %v1449, %v2007
    %v2009 = vpop.f32.mrf.mxu0
    %v2010 = vadd.f32 %v1449, %v2009
    %2011 = vmatmul.bf16.gmra.mxu0 %v1378
    %v2012 = vpop.f32.mrf.mxu0
    %v2013 = vadd.f32 %v1449, %v2012
    %v2014 = vpop.f32.mrf.mxu0
    %v2015 = vadd.f32 %v1449, %v2014
    %2016 = vdwg.mxu0
    %2017 = vmatpush.bf16.msra.mxu0 %v1675
    %2018 = vmatpush.bf16.msra.mxu0 %v1673
    %2019 = vmatpush.bf16.msra.mxu0 %v1671
    %2020 = vmatpush.bf16.msra.mxu0 %v1669
    %2021 = vmatpush.bf16.msra.mxu0 %v1667
    %2022 = vmatpush.bf16.msra.mxu0 %v1665
    %2023 = vmatpush.bf16.msra.mxu0 %v1663
    %2024 = vmatpush.bf16.msra.mxu0 %v1661
    %2025 = vmatmul.bf16.gmra.mxu0 %v1351
    %v2026 = vpop.f32.mrf.mxu0
    %v2027 = vadd.f32 %v1978, %v2026
    %v2028 = vpop.f32.mrf.mxu0
    %v2029 = vadd.f32 %v1980, %v2028
    %2030 = vmatmul.bf16.gmra.mxu0 %v1355
    %v2031 = vpop.f32.mrf.mxu0
    %v2032 = vadd.f32 %v1983, %v2031
    %v2033 = vpop.f32.mrf.mxu0
    %v2034 = vadd.f32 %v1985, %v2033
    %2035 = vmatmul.bf16.gmra.mxu0 %v1359
    %v2036 = vpop.f32.mrf.mxu0
    %v2037 = vadd.f32 %v1988, %v2036
    %v2038 = vpop.f32.mrf.mxu0
    %v2039 = vadd.f32 %v1990, %v2038
    %2040 = vmatmul.bf16.gmra.mxu0 %v1363
    %v2041 = vpop.f32.mrf.mxu0
    %v2042 = vadd.f32 %v1993, %v2041
    %v2043 = vpop.f32.mrf.mxu0
    %v2044 = vadd.f32 %v1995, %v2043
    %2045 = vmatmul.bf16.gmra.mxu0 %v1367
    %v2046 = vpop.f32.mrf.mxu0
    %v2047 = vadd.f32 %v1998, %v2046
    %v2048 = vpop.f32.mrf.mxu0
    %v2049 = vadd.f32 %v2000, %v2048
    %2050 = vmatmul.bf16.gmra.mxu0 %v1371
    %v2051 = vpop.f32.mrf.mxu0
    %v2052 = vadd.f32 %v2003, %v2051
    %v2053 = vpop.f32.mrf.mxu0
    %v2054 = vadd.f32 %v2005, %v2053
    %2055 = vmatmul.bf16.gmra.mxu0 %v1375
    %v2056 = vpop.f32.mrf.mxu0
    %v2057 = vadd.f32 %v2008, %v2056
    %v2058 = vpop.f32.mrf.mxu0
    %v2059 = vadd.f32 %v2010, %v2058
    %2060 = vmatmul.bf16.gmra.mxu0 %v1379
    %v2061 = vpop.f32.mrf.mxu0
    %v2062 = vadd.f32 %v2013, %v2061
    %v2063 = vpop.f32.mrf.mxu0
    %v2064 = vadd.f32 %v2015, %v2063
    %2065 = vdwg.mxu0
    %2066 = vmatpush.bf16.msra.mxu0 %v1691
    %2067 = vmatpush.bf16.msra.mxu0 %v1689
    %2068 = vmatpush.bf16.msra.mxu0 %v1687
    %2069 = vmatpush.bf16.msra.mxu0 %v1685
    %2070 = vmatpush.bf16.msra.mxu0 %v1683
    %2071 = vmatpush.bf16.msra.mxu0 %v1681
    %2072 = vmatpush.bf16.msra.mxu0 %v1679
    %2073 = vmatpush.bf16.msra.mxu0 %v1677
    %2074 = vmatmul.bf16.gmra.mxu0 %v1352
    %v2075 = vpop.f32.mrf.mxu0
    %v2076 = vadd.f32 %v2027, %v2075
    %v2077 = vpop.f32.mrf.mxu0
    %v2078 = vadd.f32 %v2029, %v2077
    %2079 = vmatmul.bf16.gmra.mxu0 %v1356
    %v2080 = vpop.f32.mrf.mxu0
    %v2081 = vadd.f32 %v2032, %v2080
    %v2082 = vpop.f32.mrf.mxu0
    %v2083 = vadd.f32 %v2034, %v2082
    %2084 = vmatmul.bf16.gmra.mxu0 %v1360
    %v2085 = vpop.f32.mrf.mxu0
    %v2086 = vadd.f32 %v2037, %v2085
    %v2087 = vpop.f32.mrf.mxu0
    %v2088 = vadd.f32 %v2039, %v2087
    %2089 = vmatmul.bf16.gmra.mxu0 %v1364
    %v2090 = vpop.f32.mrf.mxu0
    %v2091 = vadd.f32 %v2042, %v2090
    %v2092 = vpop.f32.mrf.mxu0
    %v2093 = vadd.f32 %v2044, %v2092
    %2094 = vmatmul.bf16.gmra.mxu0 %v1368
    %v2095 = vpop.f32.mrf.mxu0
    %v2096 = vadd.f32 %v2047, %v2095
    %v2097 = vpop.f32.mrf.mxu0
    %v2098 = vadd.f32 %v2049, %v2097
    %2099 = vmatmul.bf16.gmra.mxu0 %v1372
    %v2100 = vpop.f32.mrf.mxu0
    %v2101 = vadd.f32 %v2052, %v2100
    %v2102 = vpop.f32.mrf.mxu0
    %v2103 = vadd.f32 %v2054, %v2102
    %2104 = vmatmul.bf16.gmra.mxu0 %v1376
    %v2105 = vpop.f32.mrf.mxu0
    %v2106 = vadd.f32 %v2057, %v2105
    %v2107 = vpop.f32.mrf.mxu0
    %v2108 = vadd.f32 %v2059, %v2107
    %2109 = vmatmul.bf16.gmra.mxu0 %v1380
    %v2110 = vpop.f32.mrf.mxu0
    %v2111 = vadd.f32 %v2062, %v2110
    %v2112 = vpop.f32.mrf.mxu0
    %v2113 = vadd.f32 %v2064, %v2112
    %2114 = vdwg.mxu0
    %2115 = vmatpush.bf16.msra.mxu0 %v1707
    %2116 = vmatpush.bf16.msra.mxu0 %v1705
    %2117 = vmatpush.bf16.msra.mxu0 %v1703
    %2118 = vmatpush.bf16.msra.mxu0 %v1701
    %2119 = vmatpush.bf16.msra.mxu0 %v1699
    %2120 = vmatpush.bf16.msra.mxu0 %v1697
    %2121 = vmatpush.bf16.msra.mxu0 %v1695
    %2122 = vmatpush.bf16.msra.mxu0 %v1693
    %2123 = vmatmul.bf16.gmra.mxu0 %v1353
    %v2124 = vpop.f32.mrf.mxu0
    %v2125 = vadd.f32 %v2076, %v2124
    %v2126 = vpop.f32.mrf.mxu0
    %v2127 = vadd.f32 %v2078, %v2126
    %2128 = vmatmul.bf16.gmra.mxu0 %v1357
    %v2129 = vpop.f32.mrf.mxu0
    %v2130 = vadd.f32 %v2081, %v2129
    %v2131 = vpop.f32.mrf.mxu0
    %v2132 = vadd.f32 %v2083, %v2131
    %2133 = vmatmul.bf16.gmra.mxu0 %v1361
    %v2134 = vpop.f32.mrf.mxu0
    %v2135 = vadd.f32 %v2086, %v2134
    %v2136 = vpop.f32.mrf.mxu0
    %v2137 = vadd.f32 %v2088, %v2136
    %2138 = vmatmul.bf16.gmra.mxu0 %v1365
    %v2139 = vpop.f32.mrf.mxu0
    %v2140 = vadd.f32 %v2091, %v2139
    %v2141 = vpop.f32.mrf.mxu0
    %v2142 = vadd.f32 %v2093, %v2141
    %2143 = vmatmul.bf16.gmra.mxu0 %v1369
    %v2144 = vpop.f32.mrf.mxu0
    %v2145 = vadd.f32 %v2096, %v2144
    %v2146 = vpop.f32.mrf.mxu0
    %v2147 = vadd.f32 %v2098, %v2146
    %2148 = vmatmul.bf16.gmra.mxu0 %v1373
    %v2149 = vpop.f32.mrf.mxu0
    %v2150 = vadd.f32 %v2101, %v2149
    %v2151 = vpop.f32.mrf.mxu0
    %v2152 = vadd.f32 %v2103, %v2151
    %2153 = vmatmul.bf16.gmra.mxu0 %v1377
    %v2154 = vpop.f32.mrf.mxu0
    %v2155 = vadd.f32 %v2106, %v2154
    %v2156 = vpop.f32.mrf.mxu0
    %v2157 = vadd.f32 %v2108, %v2156
    %2158 = vmatmul.bf16.gmra.mxu0 %v1381
    %v2159 = vpop.f32.mrf.mxu0
    %v2160 = vadd.f32 %v2111, %v2159
    %v2161 = vpop.f32.mrf.mxu0
    %v2162 = vadd.f32 %v2113, %v2161
    %2163 = vdwg.mxu0
    %v2164 = vmul.f32 %v1929, 0.01
    %v2165 = vmul.f32 %v2125, 0.01
    %v2166 = vmul.f32 %v1931, 0.01
    %v2167 = vmul.f32 %v2127, 0.01
    %v2168 = vmul.f32 %v1934, 0.01
    %v2169 = vmul.f32 %v2130, 0.01
    %v2170 = vmul.f32 %v1936, 0.01
    %v2171 = vmul.f32 %v2132, 0.01
    %v2172 = vmul.f32 %v1939, 0.01
    %v2173 = vmul.f32 %v2135, 0.01
    %v2174 = vmul.f32 %v1941, 0.01
    %v2175 = vmul.f32 %v2137, 0.01
    %v2176 = vmul.f32 %v1944, 0.01
    %v2177 = vmul.f32 %v2140, 0.01
    %v2178 = vmul.f32 %v1946, 0.01
    %v2179 = vmul.f32 %v2142, 0.01
    %v2180 = vmul.f32 %v1949, 0.01
    %v2181 = vmul.f32 %v2145, 0.01
    %v2182 = vmul.f32 %v1951, 0.01
    %v2183 = vmul.f32 %v2147, 0.01
    %v2184 = vmul.f32 %v1954, 0.01
    %v2185 = vmul.f32 %v2150, 0.01
    %v2186 = vmul.f32 %v1956, 0.01
    %v2187 = vmul.f32 %v2152, 0.01
    %v2188 = vmul.f32 %v1959, 0.01
    %v2189 = vmul.f32 %v2155, 0.01
    %v2190 = vmul.f32 %v1961, 0.01
    %v2191 = vmul.f32 %v2157, 0.01
    %v2192 = vmul.f32 %v1964, 0.01
    %v2193 = vmul.f32 %v2160, 0.01
    %v2194 = vmul.f32 %v1966, 0.01
    %v2195 = vmul.f32 %v2162, 0.01
    %v2196 = vmax.f32 %v1929, %v2164
    %v2197 = vmax.f32 %v2125, %v2165
    %v2198 = vmax.f32 %v1931, %v2166
    %v2199 = vmax.f32 %v2127, %v2167
    %v2200 = vmax.f32 %v1934, %v2168
    %v2201 = vmax.f32 %v2130, %v2169
    %v2202 = vmax.f32 %v1936, %v2170
    %v2203 = vmax.f32 %v2132, %v2171
    %v2204 = vmax.f32 %v1939, %v2172
    %v2205 = vmax.f32 %v2135, %v2173
    %v2206 = vmax.f32 %v1941, %v2174
    %v2207 = vmax.f32 %v2137, %v2175
    %v2208 = vmax.f32 %v1944, %v2176
    %v2209 = vmax.f32 %v2140, %v2177
    %v2210 = vmax.f32 %v1946, %v2178
    %v2211 = vmax.f32 %v2142, %v2179
    %v2212 = vmax.f32 %v1949, %v2180
    %v2213 = vmax.f32 %v2145, %v2181
    %v2214 = vmax.f32 %v1951, %v2182
    %v2215 = vmax.f32 %v2147, %v2183
    %v2216 = vmax.f32 %v1954, %v2184
    %v2217 = vmax.f32 %v2150, %v2185
    %v2218 = vmax.f32 %v1956, %v2186
    %v2219 = vmax.f32 %v2152, %v2187
    %v2220 = vmax.f32 %v1959, %v2188
    %v2221 = vmax.f32 %v2155, %v2189
    %v2222 = vmax.f32 %v1961, %v2190
    %v2223 = vmax.f32 %v2157, %v2191
    %v2224 = vmax.f32 %v1964, %v2192
    %v2225 = vmax.f32 %v2160, %v2193
    %v2226 = vmax.f32 %v1966, %v2194
    %v2227 = vmax.f32 %v2162, %v2195
    %v2228 = vpack.c.bf16 %v2198, %v2196
    %v2229 = vpack.c.bf16 %v2199, %v2197
    %v2230 = vpack.c.bf16 %v2202, %v2200
    %v2231 = vpack.c.bf16 %v2203, %v2201
    %v2232 = vpack.c.bf16 %v2206, %v2204
    %v2233 = vpack.c.bf16 %v2207, %v2205
    %v2234 = vpack.c.bf16 %v2210, %v2208
    %v2235 = vpack.c.bf16 %v2211, %v2209
    %v2236 = vpack.c.bf16 %v2214, %v2212
    %v2237 = vpack.c.bf16 %v2215, %v2213
    %v2238 = vpack.c.bf16 %v2218, %v2216
    %v2239 = vpack.c.bf16 %v2219, %v2217
    %v2240 = vpack.c.bf16 %v2222, %v2220
    %v2241 = vpack.c.bf16 %v2223, %v2221
    %v2242 = vpack.c.bf16 %v2226, %v2224
    %v2243 = vpack.c.bf16 %v2227, %v2225
    %v2244 = vld [vmem:[#allocation11] sm:$0xf]
    %v2245 = vld [vmem:[#allocation11 + $0x4] sm:$0xf]
    %v2246 = vld [vmem:[#allocation11 + $0x8] sm:$0xf]
    %v2247 = vld [vmem:[#allocation11 + $0xc] sm:$0xf]
    %v2248 = vld [vmem:[#allocation11 + $0x10] sm:$0xf]
    %v2249 = vld [vmem:[#allocation11 + $0x14] sm:$0xf]
    %v2250 = vld [vmem:[#allocation11 + $0x18] sm:$0xf]
    %v2251 = vld [vmem:[#allocation11 + $0x1c] sm:$0xf]
    %v2252 = vld [vmem:[#allocation11 + $0x20] sm:$0xf]
    %v2253 = vld [vmem:[#allocation11 + $0x24] sm:$0xf]
    %v2254 = vld [vmem:[#allocation11 + $0x28] sm:$0xf]
    %v2255 = vld [vmem:[#allocation11 + $0x2c] sm:$0xf]
    %v2256 = vld [vmem:[#allocation11 + $0x30] sm:$0xf]
    %v2257 = vld [vmem:[#allocation11 + $0x34] sm:$0xf]
    %v2258 = vld [vmem:[#allocation11 + $0x38] sm:$0xf]
    %v2259 = vld [vmem:[#allocation11 + $0x3c] sm:$0xf]
    %v2260 = vld [vmem:[#allocation11 + $0x40] sm:$0xf]
    %v2261 = vld [vmem:[#allocation11 + $0x44] sm:$0xf]
    %v2262 = vld [vmem:[#allocation11 + $0x48] sm:$0xf]
    %v2263 = vld [vmem:[#allocation11 + $0x4c] sm:$0xf]
    %v2264 = vld [vmem:[#allocation11 + $0x50] sm:$0xf]
    %v2265 = vld [vmem:[#allocation11 + $0x54] sm:$0xf]
    %v2266 = vld [vmem:[#allocation11 + $0x58] sm:$0xf]
    %v2267 = vld [vmem:[#allocation11 + $0x5c] sm:$0xf]
    %v2268 = vld [vmem:[#allocation11 + $0x60] sm:$0xf]
    %v2269 = vld [vmem:[#allocation11 + $0x64] sm:$0xf]
    %v2270 = vld [vmem:[#allocation11 + $0x68] sm:$0xf]
    %v2271 = vld [vmem:[#allocation11 + $0x6c] sm:$0xf]
    %v2272 = vld [vmem:[#allocation11 + $0x70] sm:$0xf]
    %v2273 = vld [vmem:[#allocation11 + $0x74] sm:$0xf]
    %v2274 = vld [vmem:[#allocation11 + $0x78] sm:$0xf]
    %v2275 = vld [vmem:[#allocation11 + $0x7c] sm:$0xf]
    %v2276 = vld [vmem:[%s8] sm:$0x1]
    %v2278 = vperm.slane %v2276, 0
    %v2312 = vunpack.c.l.b16 %v2244
    %v2313 = vunpack.c.l.b16 %v2245
    %v2314 = vunpack.c.l.b16 %v2246
    %v2315 = vunpack.c.l.b16 %v2247
    %v2316 = vunpack.c.l.b16 %v2248
    %v2317 = vunpack.c.l.b16 %v2249
    %v2318 = vunpack.c.l.b16 %v2250
    %v2319 = vunpack.c.l.b16 %v2251
    %v2320 = vunpack.c.l.b16 %v2252
    %v2321 = vunpack.c.l.b16 %v2253
    %v2322 = vunpack.c.l.b16 %v2254
    %v2323 = vunpack.c.l.b16 %v2255
    %v2324 = vunpack.c.l.b16 %v2256
    %v2325 = vunpack.c.l.b16 %v2257
    %v2326 = vunpack.c.l.b16 %v2258
    %v2327 = vunpack.c.l.b16 %v2259
    %v2328 = vunpack.c.l.b16 %v2260
    %v2329 = vunpack.c.l.b16 %v2261
    %v2330 = vunpack.c.l.b16 %v2262
    %v2331 = vunpack.c.l.b16 %v2263
    %v2332 = vunpack.c.l.b16 %v2264
    %v2333 = vunpack.c.l.b16 %v2265
    %v2334 = vunpack.c.l.b16 %v2266
    %v2335 = vunpack.c.l.b16 %v2267
    %v2336 = vunpack.c.l.b16 %v2268
    %v2337 = vunpack.c.l.b16 %v2269
    %v2338 = vunpack.c.l.b16 %v2270
    %v2339 = vunpack.c.l.b16 %v2271
    %v2340 = vunpack.c.l.b16 %v2272
    %v2341 = vunpack.c.l.b16 %v2273
    %v2342 = vunpack.c.l.b16 %v2274
    %v2343 = vunpack.c.l.b16 %v2275
    %v2344 = vpack.c.b16 %v2313, %v2312
    %v2345 = vpack.c.b16 %v2315, %v2314
    %v2346 = vpack.c.b16 %v2317, %v2316
    %v2347 = vpack.c.b16 %v2319, %v2318
    %v2348 = vpack.c.b16 %v2321, %v2320
    %v2349 = vpack.c.b16 %v2323, %v2322
    %v2350 = vpack.c.b16 %v2325, %v2324
    %v2351 = vpack.c.b16 %v2327, %v2326
    %v2352 = vpack.c.b16 %v2329, %v2328
    %v2353 = vpack.c.b16 %v2331, %v2330
    %v2354 = vpack.c.b16 %v2333, %v2332
    %v2355 = vpack.c.b16 %v2335, %v2334
    %v2356 = vpack.c.b16 %v2337, %v2336
    %v2357 = vpack.c.b16 %v2339, %v2338
    %v2358 = vpack.c.b16 %v2341, %v2340
    %v2359 = vpack.c.b16 %v2343, %v2342
    %2376 = vmatpush.bf16.msra.mxu0 %v2351
    %2377 = vmatpush.bf16.msra.mxu0 %v2350
    %2378 = vmatpush.bf16.msra.mxu0 %v2349
    %2379 = vmatpush.bf16.msra.mxu0 %v2348
    %2380 = vmatpush.bf16.msra.mxu0 %v2347
    %2381 = vmatpush.bf16.msra.mxu0 %v2346
    %2382 = vmatpush.bf16.msra.mxu0 %v2345
    %2383 = vmatpush.bf16.msra.mxu0 %v2344
    %2384 = vmatmul.bf16.gmra.mxu0 %v2228
    %v2385 = vpop.f32.mrf.mxu0
    %v2386 = vadd.f32 %v2278, %v2385
    %v2387 = vpop.f32.mrf.mxu0
    %v2388 = vadd.f32 %v2278, %v2387
    %2389 = vmatmul.bf16.gmra.mxu0 %v2230
    %v2390 = vpop.f32.mrf.mxu0
    %v2391 = vadd.f32 %v2278, %v2390
    %v2392 = vpop.f32.mrf.mxu0
    %v2393 = vadd.f32 %v2278, %v2392
    %2394 = vmatmul.bf16.gmra.mxu0 %v2232
    %v2395 = vpop.f32.mrf.mxu0
    %v2396 = vadd.f32 %v2278, %v2395
    %v2397 = vpop.f32.mrf.mxu0
    %v2398 = vadd.f32 %v2278, %v2397
    %2399 = vmatmul.bf16.gmra.mxu0 %v2234
    %v2400 = vpop.f32.mrf.mxu0
    %v2401 = vadd.f32 %v2278, %v2400
    %v2402 = vpop.f32.mrf.mxu0
    %v2403 = vadd.f32 %v2278, %v2402
    %2404 = vmatmul.bf16.gmra.mxu0 %v2236
    %v2405 = vpop.f32.mrf.mxu0
    %v2406 = vadd.f32 %v2278, %v2405
    %v2407 = vpop.f32.mrf.mxu0
    %v2408 = vadd.f32 %v2278, %v2407
    %2409 = vmatmul.bf16.gmra.mxu0 %v2238
    %v2410 = vpop.f32.mrf.mxu0
    %v2411 = vadd.f32 %v2278, %v2410
    %v2412 = vpop.f32.mrf.mxu0
    %v2413 = vadd.f32 %v2278, %v2412
    %2414 = vmatmul.bf16.gmra.mxu0 %v2240
    %v2415 = vpop.f32.mrf.mxu0
    %v2416 = vadd.f32 %v2278, %v2415
    %v2417 = vpop.f32.mrf.mxu0
    %v2418 = vadd.f32 %v2278, %v2417
    %2419 = vmatmul.bf16.gmra.mxu0 %v2242
    %v2420 = vpop.f32.mrf.mxu0
    %v2421 = vadd.f32 %v2278, %v2420
    %v2422 = vpop.f32.mrf.mxu0
    %v2423 = vadd.f32 %v2278, %v2422
    %2424 = vdwg.mxu0
    %2425 = vmatpush.bf16.msra.mxu0 %v2359
    %2426 = vmatpush.bf16.msra.mxu0 %v2358
    %2427 = vmatpush.bf16.msra.mxu0 %v2357
    %2428 = vmatpush.bf16.msra.mxu0 %v2356
    %2429 = vmatpush.bf16.msra.mxu0 %v2355
    %2430 = vmatpush.bf16.msra.mxu0 %v2354
    %2431 = vmatpush.bf16.msra.mxu0 %v2353
    %2432 = vmatpush.bf16.msra.mxu0 %v2352
    %2433 = vmatmul.bf16.gmra.mxu0 %v2229
    %v2434 = vpop.f32.mrf.mxu0
    %v2435 = vadd.f32 %v2386, %v2434
    %v2436 = vpop.f32.mrf.mxu0
    %v2437 = vadd.f32 %v2388, %v2436
    %2438 = vmatmul.bf16.gmra.mxu0 %v2231
    %v2439 = vpop.f32.mrf.mxu0
    %v2440 = vadd.f32 %v2391, %v2439
    %v2441 = vpop.f32.mrf.mxu0
    %v2442 = vadd.f32 %v2393, %v2441
    %2443 = vmatmul.bf16.gmra.mxu0 %v2233
    %v2444 = vpop.f32.mrf.mxu0
    %v2445 = vadd.f32 %v2396, %v2444
    %v2446 = vpop.f32.mrf.mxu0
    %v2447 = vadd.f32 %v2398, %v2446
    %2448 = vmatmul.bf16.gmra.mxu0 %v2235
    %v2449 = vpop.f32.mrf.mxu0
    %v2450 = vadd.f32 %v2401, %v2449
    %v2451 = vpop.f32.mrf.mxu0
    %v2452 = vadd.f32 %v2403, %v2451
    %2453 = vmatmul.bf16.gmra.mxu0 %v2237
    %v2454 = vpop.f32.mrf.mxu0
    %v2455 = vadd.f32 %v2406, %v2454
    %v2456 = vpop.f32.mrf.mxu0
    %v2457 = vadd.f32 %v2408, %v2456
    %2458 = vmatmul.bf16.gmra.mxu0 %v2239
    %v2459 = vpop.f32.mrf.mxu0
    %v2460 = vadd.f32 %v2411, %v2459
    %v2461 = vpop.f32.mrf.mxu0
    %v2462 = vadd.f32 %v2413, %v2461
    %2463 = vmatmul.bf16.gmra.mxu0 %v2241
    %v2464 = vpop.f32.mrf.mxu0
    %v2465 = vadd.f32 %v2416, %v2464
    %v2466 = vpop.f32.mrf.mxu0
    %v2467 = vadd.f32 %v2418, %v2466
    %2468 = vmatmul.bf16.gmra.mxu0 %v2243
    %v2469 = vpop.f32.mrf.mxu0
    %v2470 = vadd.f32 %v2421, %v2469
    %v2471 = vpop.f32.mrf.mxu0
    %v2472 = vadd.f32 %v2423, %v2471
    %2473 = vdwg.mxu0
    %v2474 = vmul.f32 %v2435, 0.01
    %v2475 = vmul.f32 %v2437, 0.01
    %v2476 = vmul.f32 %v2440, 0.01
    %v2477 = vmul.f32 %v2442, 0.01
    %v2478 = vmul.f32 %v2445, 0.01
    %v2479 = vmul.f32 %v2447, 0.01
    %v2480 = vmul.f32 %v2450, 0.01
    %v2481 = vmul.f32 %v2452, 0.01
    %v2482 = vmul.f32 %v2455, 0.01
    %v2483 = vmul.f32 %v2457, 0.01
    %v2484 = vmul.f32 %v2460, 0.01
    %v2485 = vmul.f32 %v2462, 0.01
    %v2486 = vmul.f32 %v2465, 0.01
    %v2487 = vmul.f32 %v2467, 0.01
    %v2488 = vmul.f32 %v2470, 0.01
    %v2489 = vmul.f32 %v2472, 0.01
    %v2490 = vmax.f32 %v2435, %v2474
    %v2491 = vmax.f32 %v2437, %v2475
    %v2492 = vmax.f32 %v2440, %v2476
    %v2493 = vmax.f32 %v2442, %v2477
    %v2494 = vmax.f32 %v2445, %v2478
    %v2495 = vmax.f32 %v2447, %v2479
    %v2496 = vmax.f32 %v2450, %v2480
    %v2497 = vmax.f32 %v2452, %v2481
    %v2498 = vmax.f32 %v2455, %v2482
    %v2499 = vmax.f32 %v2457, %v2483
    %v2500 = vmax.f32 %v2460, %v2484
    %v2501 = vmax.f32 %v2462, %v2485
    %v2502 = vmax.f32 %v2465, %v2486
    %v2503 = vmax.f32 %v2467, %v2487
    %v2504 = vmax.f32 %v2470, %v2488
    %v2505 = vmax.f32 %v2472, %v2489
    %v2506 = vld [vmem:[%s9] sm:$0x1]
    %v2508 = vperm.slane %v2506, 0
    %v2510 = vmul.f32 %v2490, %v2508
    %v2511 = vmul.f32 %v2491, %v2508
    %v2512 = vmul.f32 %v2492, %v2508
    %v2513 = vmul.f32 %v2493, %v2508
    %v2514 = vmul.f32 %v2494, %v2508
    %v2515 = vmul.f32 %v2495, %v2508
    %v2516 = vmul.f32 %v2496, %v2508
    %v2517 = vmul.f32 %v2497, %v2508
    %v2518 = vmul.f32 %v2498, %v2508
    %v2519 = vmul.f32 %v2499, %v2508
    %v2520 = vmul.f32 %v2500, %v2508
    %v2521 = vmul.f32 %v2501, %v2508
    %v2522 = vmul.f32 %v2502, %v2508
    %v2523 = vmul.f32 %v2503, %v2508
    %v2524 = vmul.f32 %v2504, %v2508
    %v2525 = vmul.f32 %v2505, %v2508
    %2526 = vadd.xlane.f32.xlu0 %v2510
    %v2527 = vpop.xlane.xlu0 %2526
    %2528 = vadd.xlane.f32.xlu0 %v2511
    %v2529 = vpop.xlane.xlu0 %2528
    %2530 = vadd.xlane.f32.xlu0 %v2512
    %v2531 = vpop.xlane.xlu0 %2530
    %2532 = vadd.xlane.f32.xlu0 %v2513
    %v2533 = vpop.xlane.xlu0 %2532
    %2534 = vadd.xlane.f32.xlu0 %v2514
    %v2535 = vpop.xlane.xlu0 %2534
    %2536 = vadd.xlane.f32.xlu0 %v2515
    %v2537 = vpop.xlane.xlu0 %2536
    %2538 = vadd.xlane.f32.xlu0 %v2516
    %v2539 = vpop.xlane.xlu0 %2538
    %2540 = vadd.xlane.f32.xlu0 %v2517
    %v2541 = vpop.xlane.xlu0 %2540
    %2542 = vadd.xlane.f32.xlu0 %v2518
    %v2543 = vpop.xlane.xlu0 %2542
    %2544 = vadd.xlane.f32.xlu0 %v2519
    %v2545 = vpop.xlane.xlu0 %2544
    %2546 = vadd.xlane.f32.xlu0 %v2520
    %v2547 = vpop.xlane.xlu0 %2546
    %2548 = vadd.xlane.f32.xlu0 %v2521
    %v2549 = vpop.xlane.xlu0 %2548
    %2550 = vadd.xlane.f32.xlu0 %v2522
    %v2551 = vpop.xlane.xlu0 %2550
    %2552 = vadd.xlane.f32.xlu0 %v2523
    %v2553 = vpop.xlane.xlu0 %2552
    %2554 = vadd.xlane.f32.xlu0 %v2524
    %v2555 = vpop.xlane.xlu0 %2554
    %2556 = vadd.xlane.f32.xlu0 %v2525
    %v2557 = vpop.xlane.xlu0 %2556
    %v2558 = vld [vmem:[#allocation2] sm:$0x1]
    %v2560 = vperm.slane %v2558, 0
    %v2562 = vadd.f32 %v2527, %v2560
    %v2563 = vadd.f32 %v2529, %v2560
    %v2564 = vadd.f32 %v2531, %v2560
    %v2565 = vadd.f32 %v2533, %v2560
    %v2566 = vadd.f32 %v2535, %v2560
    %v2567 = vadd.f32 %v2537, %v2560
    %v2568 = vadd.f32 %v2539, %v2560
    %v2569 = vadd.f32 %v2541, %v2560
    %v2570 = vadd.f32 %v2543, %v2560
    %v2571 = vadd.f32 %v2545, %v2560
    %v2572 = vadd.f32 %v2547, %v2560
    %v2573 = vadd.f32 %v2549, %v2560
    %v2574 = vadd.f32 %v2551, %v2560
    %v2575 = vadd.f32 %v2553, %v2560
    %v2576 = vadd.f32 %v2555, %v2560
    %v2577 = vadd.f32 %v2557, %v2560
    %v2578 = vmul.f32 %v2562, 0.01
    %v2579 = vmul.f32 %v2563, 0.01
    %v2580 = vmul.f32 %v2564, 0.01
    %v2581 = vmul.f32 %v2565, 0.01
    %v2582 = vmul.f32 %v2566, 0.01
    %v2583 = vmul.f32 %v2567, 0.01
    %v2584 = vmul.f32 %v2568, 0.01
    %v2585 = vmul.f32 %v2569, 0.01
    %v2586 = vmul.f32 %v2570, 0.01
    %v2587 = vmul.f32 %v2571, 0.01
    %v2588 = vmul.f32 %v2572, 0.01
    %v2589 = vmul.f32 %v2573, 0.01
    %v2590 = vmul.f32 %v2574, 0.01
    %v2591 = vmul.f32 %v2575, 0.01
    %v2592 = vmul.f32 %v2576, 0.01
    %v2593 = vmul.f32 %v2577, 0.01
    %v2594 = vmax.f32 %v2562, %v2578
    %v2595 = vmax.f32 %v2563, %v2579
    %v2596 = vmax.f32 %v2564, %v2580
    %v2597 = vmax.f32 %v2565, %v2581
    %v2598 = vmax.f32 %v2566, %v2582
    %v2599 = vmax.f32 %v2567, %v2583
    %v2600 = vmax.f32 %v2568, %v2584
    %v2601 = vmax.f32 %v2569, %v2585
    %v2602 = vmax.f32 %v2570, %v2586
    %v2603 = vmax.f32 %v2571, %v2587
    %v2604 = vmax.f32 %v2572, %v2588
    %v2605 = vmax.f32 %v2573, %v2589
    %v2606 = vmax.f32 %v2574, %v2590
    %v2607 = vmax.f32 %v2575, %v2591
    %v2608 = vmax.f32 %v2576, %v2592
    %v2609 = vmax.f32 %v2577, %v2593
    %vm2610 = vcmp.gt.f32.partialorder %v2594, 20.0
    %vm2611 = vcmp.gt.f32.partialorder %v2595, 20.0
    %vm2612 = vcmp.gt.f32.partialorder %v2596, 20.0
    %vm2613 = vcmp.gt.f32.partialorder %v2597, 20.0
    %vm2614 = vcmp.gt.f32.partialorder %v2598, 20.0
    %vm2615 = vcmp.gt.f32.partialorder %v2599, 20.0
    %vm2616 = vcmp.gt.f32.partialorder %v2600, 20.0
    %vm2617 = vcmp.gt.f32.partialorder %v2601, 20.0
    %vm2618 = vcmp.gt.f32.partialorder %v2602, 20.0
    %vm2619 = vcmp.gt.f32.partialorder %v2603, 20.0
    %vm2620 = vcmp.gt.f32.partialorder %v2604, 20.0
    %vm2621 = vcmp.gt.f32.partialorder %v2605, 20.0
    %vm2622 = vcmp.gt.f32.partialorder %v2606, 20.0
    %vm2623 = vcmp.gt.f32.partialorder %v2607, 20.0
    %vm2624 = vcmp.gt.f32.partialorder %v2608, 20.0
    %vm2625 = vcmp.gt.f32.partialorder %v2609, 20.0
    %v2626 = vmin.f32 %v2594, 20.0
    %v2627 = vmin.f32 %v2595, 20.0
    %v2628 = vmin.f32 %v2596, 20.0
    %v2629 = vmin.f32 %v2597, 20.0
    %v2630 = vmin.f32 %v2598, 20.0
    %v2631 = vmin.f32 %v2599, 20.0
    %v2632 = vmin.f32 %v2600, 20.0
    %v2633 = vmin.f32 %v2601, 20.0
    %v2634 = vmin.f32 %v2602, 20.0
    %v2635 = vmin.f32 %v2603, 20.0
    %v2636 = vmin.f32 %v2604, 20.0
    %v2637 = vmin.f32 %v2605, 20.0
    %v2638 = vmin.f32 %v2606, 20.0
    %v2639 = vmin.f32 %v2607, 20.0
    %v2640 = vmin.f32 %v2608, 20.0
    %v2641 = vmin.f32 %v2609, 20.0
    %v2642 = vmul.f32 %v2626, 1.442695
    %v2643 = vpow.pop %v2642
    %v2644 = vmul.f32 %v2627, 1.442695
    %v2645 = vpow.pop %v2644
    %v2646 = vmul.f32 %v2628, 1.442695
    %v2647 = vpow.pop %v2646
    %v2648 = vmul.f32 %v2629, 1.442695
    %v2649 = vpow.pop %v2648
    %v2650 = vmul.f32 %v2630, 1.442695
    %v2651 = vpow.pop %v2650
    %v2652 = vmul.f32 %v2631, 1.442695
    %v2653 = vpow.pop %v2652
    %v2654 = vmul.f32 %v2632, 1.442695
    %v2655 = vpow.pop %v2654
    %v2656 = vmul.f32 %v2633, 1.442695
    %v2657 = vpow.pop %v2656
    %v2658 = vmul.f32 %v2634, 1.442695
    %v2659 = vpow.pop %v2658
    %v2660 = vmul.f32 %v2635, 1.442695
    %v2661 = vpow.pop %v2660
    %v2662 = vmul.f32 %v2636, 1.442695
    %v2663 = vpow.pop %v2662
    %v2664 = vmul.f32 %v2637, 1.442695
    %v2665 = vpow.pop %v2664
    %v2666 = vmul.f32 %v2638, 1.442695
    %v2667 = vpow.pop %v2666
    %v2668 = vmul.f32 %v2639, 1.442695
    %v2669 = vpow.pop %v2668
    %v2670 = vmul.f32 %v2640, 1.442695
    %v2671 = vpow.pop %v2670
    %v2672 = vmul.f32 %v2641, 1.442695
    %v2673 = vpow.pop %v2672
    %v2674 = vadd.f32 %v2643, 1.0
    %v2675 = vlog2.pop %v2674
    %v2676 = vmul.f32 %v2675, 0.6931472
    %v2677 = vmul.f32 -0.5, %v2643
    %v2678 = vadd.f32 %v2677, 1.0
    %v2679 = vmul.f32 %v2678, %v2643
    %v2680 = vand.u32 2147483647, %v2643
    %vm2681 = vcmp.lt.f32.partialorder %v2680, 0.0004427343
    %v2682 = vsel %vm2681, %v2679, %v2676
    %v2683 = vadd.f32 %v2645, 1.0
    %v2684 = vlog2.pop %v2683
    %v2685 = vmul.f32 %v2684, 0.6931472
    %v2686 = vmul.f32 -0.5, %v2645
    %v2687 = vadd.f32 %v2686, 1.0
    %v2688 = vmul.f32 %v2687, %v2645
    %v2689 = vand.u32 2147483647, %v2645
    %vm2690 = vcmp.lt.f32.partialorder %v2689, 0.0004427343
    %v2691 = vsel %vm2690, %v2688, %v2685
    %v2692 = vadd.f32 %v2647, 1.0
    %v2693 = vlog2.pop %v2692
    %v2694 = vmul.f32 %v2693, 0.6931472
    %v2695 = vmul.f32 -0.5, %v2647
    %v2696 = vadd.f32 %v2695, 1.0
    %v2697 = vmul.f32 %v2696, %v2647
    %v2698 = vand.u32 2147483647, %v2647
    %vm2699 = vcmp.lt.f32.partialorder %v2698, 0.0004427343
    %v2700 = vsel %vm2699, %v2697, %v2694
    %v2701 = vadd.f32 %v2649, 1.0
    %v2702 = vlog2.pop %v2701
    %v2703 = vmul.f32 %v2702, 0.6931472
    %v2704 = vmul.f32 -0.5, %v2649
    %v2705 = vadd.f32 %v2704, 1.0
    %v2706 = vmul.f32 %v2705, %v2649
    %v2707 = vand.u32 2147483647, %v2649
    %vm2708 = vcmp.lt.f32.partialorder %v2707, 0.0004427343
    %v2709 = vsel %vm2708, %v2706, %v2703
    %v2710 = vadd.f32 %v2651, 1.0
    %v2711 = vlog2.pop %v2710
    %v2712 = vmul.f32 %v2711, 0.6931472
    %v2713 = vmul.f32 -0.5, %v2651
    %v2714 = vadd.f32 %v2713, 1.0
    %v2715 = vmul.f32 %v2714, %v2651
    %v2716 = vand.u32 2147483647, %v2651
    %vm2717 = vcmp.lt.f32.partialorder %v2716, 0.0004427343
    %v2718 = vsel %vm2717, %v2715, %v2712
    %v2719 = vadd.f32 %v2653, 1.0
    %v2720 = vlog2.pop %v2719
    %v2721 = vmul.f32 %v2720, 0.6931472
    %v2722 = vmul.f32 -0.5, %v2653
    %v2723 = vadd.f32 %v2722, 1.0
    %v2724 = vmul.f32 %v2723, %v2653
    %v2725 = vand.u32 2147483647, %v2653
    %vm2726 = vcmp.lt.f32.partialorder %v2725, 0.0004427343
    %v2727 = vsel %vm2726, %v2724, %v2721
    %v2728 = vadd.f32 %v2655, 1.0
    %v2729 = vlog2.pop %v2728
    %v2730 = vmul.f32 %v2729, 0.6931472
    %v2731 = vmul.f32 -0.5, %v2655
    %v2732 = vadd.f32 %v2731, 1.0
    %v2733 = vmul.f32 %v2732, %v2655
    %v2734 = vand.u32 2147483647, %v2655
    %vm2735 = vcmp.lt.f32.partialorder %v2734, 0.0004427343
    %v2736 = vsel %vm2735, %v2733, %v2730
    %v2737 = vadd.f32 %v2657, 1.0
    %v2738 = vlog2.pop %v2737
    %v2739 = vmul.f32 %v2738, 0.6931472
    %v2740 = vmul.f32 -0.5, %v2657
    %v2741 = vadd.f32 %v2740, 1.0
    %v2742 = vmul.f32 %v2741, %v2657
    %v2743 = vand.u32 2147483647, %v2657
    %vm2744 = vcmp.lt.f32.partialorder %v2743, 0.0004427343
    %v2745 = vsel %vm2744, %v2742, %v2739
    %v2746 = vadd.f32 %v2659, 1.0
    %v2747 = vlog2.pop %v2746
    %v2748 = vmul.f32 %v2747, 0.6931472
    %v2749 = vmul.f32 -0.5, %v2659
    %v2750 = vadd.f32 %v2749, 1.0
    %v2751 = vmul.f32 %v2750, %v2659
    %v2752 = vand.u32 2147483647, %v2659
    %vm2753 = vcmp.lt.f32.partialorder %v2752, 0.0004427343
    %v2754 = vsel %vm2753, %v2751, %v2748
    %v2755 = vadd.f32 %v2661, 1.0
    %v2756 = vlog2.pop %v2755
    %v2757 = vmul.f32 %v2756, 0.6931472
    %v2758 = vmul.f32 -0.5, %v2661
    %v2759 = vadd.f32 %v2758, 1.0
    %v2760 = vmul.f32 %v2759, %v2661
    %v2761 = vand.u32 2147483647, %v2661
    %vm2762 = vcmp.lt.f32.partialorder %v2761, 0.0004427343
    %v2763 = vsel %vm2762, %v2760, %v2757
    %v2764 = vadd.f32 %v2663, 1.0
    %v2765 = vlog2.pop %v2764
    %v2766 = vmul.f32 %v2765, 0.6931472
    %v2767 = vmul.f32 -0.5, %v2663
    %v2768 = vadd.f32 %v2767, 1.0
    %v2769 = vmul.f32 %v2768, %v2663
    %v2770 = vand.u32 2147483647, %v2663
    %vm2771 = vcmp.lt.f32.partialorder %v2770, 0.0004427343
    %v2772 = vsel %vm2771, %v2769, %v2766
    %v2773 = vadd.f32 %v2665, 1.0
    %v2774 = vlog2.pop %v2773
    %v2775 = vmul.f32 %v2774, 0.6931472
    %v2776 = vmul.f32 -0.5, %v2665
    %v2777 = vadd.f32 %v2776, 1.0
    %v2778 = vmul.f32 %v2777, %v2665
    %v2779 = vand.u32 2147483647, %v2665
    %vm2780 = vcmp.lt.f32.partialorder %v2779, 0.0004427343
    %v2781 = vsel %vm2780, %v2778, %v2775
    %v2782 = vadd.f32 %v2667, 1.0
    %v2783 = vlog2.pop %v2782
    %v2784 = vmul.f32 %v2783, 0.6931472
    %v2785 = vmul.f32 -0.5, %v2667
    %v2786 = vadd.f32 %v2785, 1.0
    %v2787 = vmul.f32 %v2786, %v2667
    %v2788 = vand.u32 2147483647, %v2667
    %vm2789 = vcmp.lt.f32.partialorder %v2788, 0.0004427343
    %v2790 = vsel %vm2789, %v2787, %v2784
    %v2791 = vadd.f32 %v2669, 1.0
    %v2792 = vlog2.pop %v2791
    %v2793 = vmul.f32 %v2792, 0.6931472
    %v2794 = vmul.f32 -0.5, %v2669
    %v2795 = vadd.f32 %v2794, 1.0
    %v2796 = vmul.f32 %v2795, %v2669
    %v2797 = vand.u32 2147483647, %v2669
    %vm2798 = vcmp.lt.f32.partialorder %v2797, 0.0004427343
    %v2799 = vsel %vm2798, %v2796, %v2793
    %v2800 = vadd.f32 %v2671, 1.0
    %v2801 = vlog2.pop %v2800
    %v2802 = vmul.f32 %v2801, 0.6931472
    %v2803 = vmul.f32 -0.5, %v2671
    %v2804 = vadd.f32 %v2803, 1.0
    %v2805 = vmul.f32 %v2804, %v2671
    %v2806 = vand.u32 2147483647, %v2671
    %vm2807 = vcmp.lt.f32.partialorder %v2806, 0.0004427343
    %v2808 = vsel %vm2807, %v2805, %v2802
    %v2809 = vadd.f32 %v2673, 1.0
    %v2810 = vlog2.pop %v2809
    %v2811 = vmul.f32 %v2810, 0.6931472
    %v2812 = vmul.f32 -0.5, %v2673
    %v2813 = vadd.f32 %v2812, 1.0
    %v2814 = vmul.f32 %v2813, %v2673
    %v2815 = vand.u32 2147483647, %v2673
    %vm2816 = vcmp.lt.f32.partialorder %v2815, 0.0004427343
    %v2817 = vsel %vm2816, %v2814, %v2811
    %v2818 = vsel %vm2610, %v2594, %v2682
    %v2819 = vsel %vm2611, %v2595, %v2691
    %v2820 = vsel %vm2612, %v2596, %v2700
    %v2821 = vsel %vm2613, %v2597, %v2709
    %v2822 = vsel %vm2614, %v2598, %v2718
    %v2823 = vsel %vm2615, %v2599, %v2727
    %v2824 = vsel %vm2616, %v2600, %v2736
    %v2825 = vsel %vm2617, %v2601, %v2745
    %v2826 = vsel %vm2618, %v2602, %v2754
    %v2827 = vsel %vm2619, %v2603, %v2763
    %v2828 = vsel %vm2620, %v2604, %v2772
    %v2829 = vsel %vm2621, %v2605, %v2781
    %v2830 = vsel %vm2622, %v2606, %v2790
    %v2831 = vsel %vm2623, %v2607, %v2799
    %v2832 = vsel %vm2624, %v2608, %v2808
    %v2833 = vsel %vm2625, %v2609, %v2817
    %v2834 = vtanh.pop %v2818
    %v2835 = vtanh.pop %v2819
    %v2836 = vtanh.pop %v2820
    %v2837 = vtanh.pop %v2821
    %v2838 = vtanh.pop %v2822
    %v2839 = vtanh.pop %v2823
    %v2840 = vtanh.pop %v2824
    %v2841 = vtanh.pop %v2825
    %v2842 = vtanh.pop %v2826
    %v2843 = vtanh.pop %v2827
    %v2844 = vtanh.pop %v2828
    %v2845 = vtanh.pop %v2829
    %v2846 = vtanh.pop %v2830
    %v2847 = vtanh.pop %v2831
    %v2848 = vtanh.pop %v2832
    %v2849 = vtanh.pop %v2833
    %v2850 = vmul.f32 %v2594, %v2834
    %v2851 = vmul.f32 %v2595, %v2835
    %v2852 = vmul.f32 %v2596, %v2836
    %v2853 = vmul.f32 %v2597, %v2837
    %v2854 = vmul.f32 %v2598, %v2838
    %v2855 = vmul.f32 %v2599, %v2839
    %v2856 = vmul.f32 %v2600, %v2840
    %v2857 = vmul.f32 %v2601, %v2841
    %v2858 = vmul.f32 %v2602, %v2842
    %v2859 = vmul.f32 %v2603, %v2843
    %v2860 = vmul.f32 %v2604, %v2844
    %v2861 = vmul.f32 %v2605, %v2845
    %v2862 = vmul.f32 %v2606, %v2846
    %v2863 = vmul.f32 %v2607, %v2847
    %v2864 = vmul.f32 %v2608, %v2848
    %v2865 = vmul.f32 %v2609, %v2849
    %vm2866 = vcmask 7168
    %2867 = vst.msk [vmem:[%s11] sm:$0xff] %vm2866, %v2850
    %2868 = vst.msk [vmem:[%s11 + $0x8] sm:$0xff] %vm2866, %v2851
    %2869 = vst.msk [vmem:[%s11 + $0x10] sm:$0xff] %vm2866, %v2852
    %2870 = vst.msk [vmem:[%s11 + $0x18] sm:$0xff] %vm2866, %v2853
    %2871 = vst.msk [vmem:[%s11 + $0x20] sm:$0xff] %vm2866, %v2854
    %2872 = vst.msk [vmem:[%s11 + $0x28] sm:$0xff] %vm2866, %v2855
    %2873 = vst.msk [vmem:[%s11 + $0x30] sm:$0xff] %vm2866, %v2856
    %2874 = vst.msk [vmem:[%s11 + $0x38] sm:$0xff] %vm2866, %v2857
    %2875 = vst.msk [vmem:[%s11 + $0x40] sm:$0xff] %vm2866, %v2858
    %2876 = vst.msk [vmem:[%s11 + $0x48] sm:$0xff] %vm2866, %v2859
    %2877 = vst.msk [vmem:[%s11 + $0x50] sm:$0xff] %vm2866, %v2860
    %2878 = vst.msk [vmem:[%s11 + $0x58] sm:$0xff] %vm2866, %v2861
    %2879 = vst.msk [vmem:[%s11 + $0x60] sm:$0xff] %vm2866, %v2862
    %2880 = vst.msk [vmem:[%s11 + $0x68] sm:$0xff] %vm2866, %v2863
    %2881 = vst.msk [vmem:[%s11 + $0x70] sm:$0xff] %vm2866, %v2864
    %2882 = vst.msk [vmem:[%s11 + $0x78] sm:$0xff] %vm2866, %v2865
    // Predicated region
    $region70: #{tpu_custom_call.1} parent=1 // pred_check
      _
    $region71: #{tpu_custom_call.1} parent=1 // pred_check_branch
      %2884 = sbr.rel (0) target = $region73
    $region72: #{tpu_custom_call.1} parent=1 // pred_region
      _
    $region73: #{tpu_custom_call.1} parent=1 // pred_fallthru
      _
    // Predicated region
    $region74: #{tpu_custom_call.1} parent=1 // pred_check
      _
    $region75: #{tpu_custom_call.1} parent=1 // pred_check_branch
      %2886 = sbr.rel (0) target = $region77
    $region76: #{tpu_custom_call.1} parent=1 // pred_region
      _
    $region77: #{tpu_custom_call.1} parent=1 // pred_fallthru
      _
    %2887 = vsyncpa [#allocation4], 1
    %2888 = vsyncpa [#allocation6], 1
    %2889 = vsyncpa [#allocation9], 1
    %2890 = vsyncpa [#allocation12], 1

</llo_original>
